<compile_context>
chip_gen: v7x
topology: tpu7x:2x2x1
jax: 0.10.0
libtpu: 0.0.40
codegen_flags: <defaults>
</compile_context>

<pallas_src>
import functools
import math

import jax
import jax.numpy as jnp
from jax.experimental import pallas as pl
from jax.experimental.pallas import tpu as pltpu

ENC_SCALE = 6                    # self.encScale
IN_COORDS = 2                    # x has 2 coordinates per sample
IN_ENC = 4 * ENC_SCALE           # 24 live encoded features
ENC_PAD = 128                    # lane-padded encoding width
HIDDEN = 256
OUT_DIM = 3
DEFAULT_TB = 1024                # target batch tile (multiple of 256)


def _round_up(n, m):
    return (n + m - 1) // m * m


def _choose_tb(b, tb_target=DEFAULT_TB):
    """Pick the batch tile: big (amortize per-step + MXU boundary costs), but
    with bounded zero-padding and an even grid length >= 2 for v7x dual-TC."""
    b8 = _round_up(b, 8)
    if b8 <= tb_target:
        return b8                          # small batch: single tile, no waste
    n_tiles = max(2, -(-b // tb_target))   # ceil(b / target), at least 2
    if n_tiles % 2:                        # even grid so both v7x TCs stay busy
        n_tiles += 1
    return _round_up(-(-b // n_tiles), 256)


def posenc_mlp_kernel(num_chunks, x_ref, m_ref, ph_ref,
                      w1_ref, b1_ref, w2_ref, b2_ref, w3_ref, b3_ref,
                      w4_ref, b4_ref, w5_ref, b5_ref, w6_ref, b6_ref,
                      out_ref):
    """Positional encoding + 6-layer MLP for one (TB, 2) batch tile.

    m_ref is (2, 128) with 2*pi * 2**j frequencies scattered into the first 24
    columns (even column = cos slot, odd = sin slot, zeros beyond); ph_ref adds
    pi/2 on the cos columns so  enc = sin(x0*m[0] + x1*m[1] + phase)  reproduces
    torch.stack((cos, sin), dim=2).reshape(B, 24) exactly (padded columns are
    killed by zero rows in W1).  The tile is processed as `num_chunks`
    independent row chunks, layer-major, so the MXU pipelines across chunks.
    """
    tb = x_ref.shape[0]
    cs = tb // num_chunks

    m0 = m_ref[0:1, :]                     # (1, 128) f32
    m1 = m_ref[1:2, :]
    ph = ph_ref[...]                       # (1, 128) f32

    # --- positional encoding: pure VPU + EUP, full f32, lane-dense 128 wide ---
    hs = []
    for c in range(num_chunks):
        xc = x_ref[c * cs:(c + 1) * cs, :]                       # (cs, 2) f32
        angle = xc[:, 0:1] * m0 + xc[:, 1:2] * m1 + ph           # (cs, 128) f32
        hs.append(jnp.sin(angle).astype(jnp.bfloat16))

    # --- 5 x (Linear + ReLU): bf16 operands, f32 accumulate, layer-major ------
    for w_ref, b_ref in ((w1_ref, b1_ref), (w2_ref, b2_ref), (w3_ref, b3_ref),
                         (w4_ref, b4_ref), (w5_ref, b5_ref)):
        w = w_ref[...]
        b = b_ref[...]
        hs = [jnp.maximum(
                  jnp.dot(h, w, preferred_element_type=jnp.float32) + b, 0.0
              ).astype(jnp.bfloat16) for h in hs]                # (cs, 256)

    # --- final Linear + Sigmoid ----------------------------------------------
    w6 = w6_ref[...]
    b6 = b6_ref[...]
    for c in range(num_chunks):
        logits = jnp.dot(hs[c], w6, preferred_element_type=jnp.float32) + b6
        out_ref[c * cs:(c + 1) * cs, :] = jax.nn.sigmoid(logits).astype(out_ref.dtype)


def build_freq_and_phase():
    """(2, 128) frequency matrix (2*pi folded in) and (1, 128) phase vector."""
    two_pi = 2.0 * math.pi
    pows = 2.0 ** jnp.arange(ENC_SCALE, dtype=jnp.float32)             # (6,)
    m = jnp.zeros((IN_COORDS, ENC_PAD), dtype=jnp.float32)
    ph = jnp.zeros((1, ENC_PAD), dtype=jnp.float32)
    for i in range(IN_COORDS):
        for j in range(ENC_SCALE):
            k = i * ENC_SCALE + j
            m = m.at[i, 2 * k].set(two_pi * pows[j])       # cos column
            m = m.at[i, 2 * k + 1].set(two_pi * pows[j])   # sin column
    for k in range(2 * ENC_SCALE):
        ph = ph.at[0, 2 * k].set(math.pi / 2.0)            # cos = sin(. + pi/2)
    return m, ph


def init_params(key):
    """Deterministic PyTorch-style (uniform +/- 1/sqrt(fan_in)) init, f32."""
    dims = [(IN_ENC, HIDDEN), (HIDDEN, HIDDEN), (HIDDEN, HIDDEN),
            (HIDDEN, HIDDEN), (HIDDEN, HIDDEN), (HIDDEN, OUT_DIM)]
    params = []
    keys = jax.random.split(key, 2 * len(dims))
    for idx, (fan_in, fan_out) in enumerate(dims):
        bound = 1.0 / math.sqrt(fan_in)
        w = jax.random.uniform(keys[2 * idx], (fan_in, fan_out),
                               jnp.float32, -bound, bound)
        b = jax.random.uniform(keys[2 * idx + 1], (1, fan_out),
                               jnp.float32, -bound, bound)
        params.append((w, b))
    return params


def prepare_kernel_params(params):
    """Pad W1 rows 24->128 with zeros; cast weights to bf16, keep biases f32."""
    prepared = []
    for layer_idx, (w, b) in enumerate(params):
        if layer_idx == 0:
            w = jnp.pad(w, ((0, ENC_PAD - IN_ENC), (0, 0)))
        prepared.append((w.astype(jnp.bfloat16), b.astype(jnp.float32)))
    return prepared


def posenc_network(x, params, *, tb=DEFAULT_TB):
    b = x.shape[0]
    tb = _choose_tb(b, tb)
    b_pad = _round_up(b, tb)
    x = x.astype(jnp.float32)
    if b_pad != b:
        x = jnp.pad(x, ((0, b_pad - b), (0, 0)))

    # Interleave two independent TB/2 chains on large tiles (hide MRF drain on
    # v5e/v6e); only when both sub-chunks stay sublane-aligned.
    num_chunks = 2 if (tb >= 512 and tb % 16 == 0) else 1

    m, ph = build_freq_and_phase()
    kparams = prepare_kernel_params(params)

    flat_args = [x, m, ph]
    in_specs = [
        pl.BlockSpec((tb, IN_COORDS), lambda i: (i, 0)),            # streamed per tile
        pl.BlockSpec((IN_COORDS, ENC_PAD), lambda i: (0, 0)),       # resident
        pl.BlockSpec((1, ENC_PAD), lambda i: (0, 0)),               # resident
    ]
    for w, bias in kparams:
        flat_args += [w, bias]
        in_specs += [pl.BlockSpec(w.shape, lambda i: (0, 0)),       # resident weights
                     pl.BlockSpec(bias.shape, lambda i: (0, 0))]    # resident biases

    # Explicit scoped-VMEM limit with headroom (per-tile activations + resident
    # weights + double-buffered x/out tiles); caps well below v7x's 64 MiB.
    weight_bytes = (2 * (ENC_PAD * HIDDEN + 4 * HIDDEN * HIDDEN + HIDDEN * OUT_DIM)
                    + 4 * (5 * HIDDEN + OUT_DIM))
    act_bytes = tb * (HIDDEN * 6 + ENC_PAD * 6)                     # f32 z + bf16 h
    io_bytes = 2 * tb * (IN_COORDS + OUT_DIM) * 4                   # double buffers
    vmem_limit = int(min(48 << 20, max(32 << 20, 2 * (weight_bytes + act_bytes + io_bytes))))

    out = pl.pallas_call(
        functools.partial(posenc_mlp_kernel, num_chunks),
        out_shape=jax.ShapeDtypeStruct((b_pad, OUT_DIM), jnp.float32),
        grid_spec=pltpu.PrefetchScalarGridSpec(
            num_scalar_prefetch=0,
            grid=(b_pad // tb,),
            in_specs=in_specs,
            out_specs=pl.BlockSpec((tb, OUT_DIM), lambda i: (i, 0)),
        ),
        compiler_params=pltpu.CompilerParams(
            dimension_semantics=("parallel",),    # v7x: shard batch over both TCs
            vmem_limit_bytes=vmem_limit),
    )(*flat_args)
    return out[:b]


def reference_forward(x, params):
    """Pure-JAX f32 replica of the PyTorch forward (semantic ground truth)."""
    pows = 2.0 ** jnp.arange(ENC_SCALE, dtype=jnp.float32)
    products = (x[:, :, None] * pows).reshape(x.shape[0], 2 * ENC_SCALE)
    sins = jnp.sin(2.0 * math.pi * products)
    coss = jnp.cos(2.0 * math.pi * products)
    enc = jnp.stack((coss, sins), axis=2).reshape(x.shape[0], IN_ENC)
    h = enc
    for w, bias in params[:-1]:
        h = jax.nn.relu(h @ w + bias)
    w6, b6 = params[-1]
    return jax.nn.sigmoid(h @ w6 + b6)


if __name__ == "__main__":
    key = jax.random.PRNGKey(0)
    k_x, k_params = jax.random.split(key)
    params = init_params(k_params)

    # Small batch: single-tile path.
    batch = 8
    x = jax.random.uniform(k_x, (batch, IN_COORDS), jnp.float32)  # coords in [0, 1)
    out = jax.block_until_ready(posenc_network(x, params))
    ref = reference_forward(x, params)
    assert out.shape == (batch, OUT_DIM), out.shape
    # bf16 weights/activations in the kernel (f32 accumulation + f32 VPU encoding):
    # tolerance reflects bf16 quantization; semantics are unchanged.
    assert jnp.allclose(out, ref, atol=2.5e-2, rtol=0.0), (
        f"max abs err {jnp.max(jnp.abs(out - ref))}")

    # Ragged larger batch: multi-tile (even grid), padded, chunk-interleaved path.
    batch2 = 1337
    x2 = jax.random.uniform(jax.random.PRNGKey(1), (batch2, IN_COORDS), jnp.float32)
    out2 = jax.block_until_ready(posenc_network(x2, params))
    ref2 = reference_forward(x2, params)
    assert out2.shape == (batch2, OUT_DIM), out2.shape
    assert jnp.allclose(out2, ref2, atol=2.5e-2, rtol=0.0), (
        f"max abs err {jnp.max(jnp.abs(out2 - ref2))}")

    print("KERNEL_OK")
</pallas_src>

<mosaic_0001>
module attributes {stable_mosaic.version = 11 : i64} {
  func.func @posenc_mlp_kernel(%arg0: i32, %arg1: memref<8x2xf32, #tpu.memory_space<vmem>>, %arg2: memref<2x128xf32, #tpu.memory_space<vmem>>, %arg3: memref<1x128xf32, #tpu.memory_space<vmem>>, %arg4: memref<128x256xbf16, #tpu.memory_space<vmem>>, %arg5: memref<1x256xf32, #tpu.memory_space<vmem>>, %arg6: memref<256x256xbf16, #tpu.memory_space<vmem>>, %arg7: memref<1x256xf32, #tpu.memory_space<vmem>>, %arg8: memref<256x256xbf16, #tpu.memory_space<vmem>>, %arg9: memref<1x256xf32, #tpu.memory_space<vmem>>, %arg10: memref<256x256xbf16, #tpu.memory_space<vmem>>, %arg11: memref<1x256xf32, #tpu.memory_space<vmem>>, %arg12: memref<256x256xbf16, #tpu.memory_space<vmem>>, %arg13: memref<1x256xf32, #tpu.memory_space<vmem>>, %arg14: memref<256x3xbf16, #tpu.memory_space<vmem>>, %arg15: memref<1x3xf32, #tpu.memory_space<vmem>>, %arg16: memref<8x3xf32, #tpu.memory_space<vmem>>) attributes {dimension_semantics = [#tpu.dimension_semantics<parallel>], iteration_bounds = array<i64: 1>, scalar_prefetch = 0 : i64, scratch_operands = 0 : i64, tpu.core_type = #tpu.core_type<tc>, window_params = [{transform_indices = @transform_0, window_bounds = array<i64: 8, 2>}, {pipeline_mode = #tpu.pipeline_mode<synchronous>, transform_indices = @transform_1, window_bounds = array<i64: 2, 128>}, {pipeline_mode = #tpu.pipeline_mode<synchronous>, transform_indices = @transform_2, window_bounds = array<i64: 1, 128>}, {pipeline_mode = #tpu.pipeline_mode<synchronous>, transform_indices = @transform_3, window_bounds = array<i64: 128, 256>}, {pipeline_mode = #tpu.pipeline_mode<synchronous>, transform_indices = @transform_4, window_bounds = array<i64: 1, 256>}, {pipeline_mode = #tpu.pipeline_mode<synchronous>, transform_indices = @transform_5, window_bounds = array<i64: 256, 256>}, {pipeline_mode = #tpu.pipeline_mode<synchronous>, transform_indices = @transform_6, window_bounds = array<i64: 1, 256>}, {pipeline_mode = #tpu.pipeline_mode<synchronous>, transform_indices = @transform_7, window_bounds = array<i64: 256, 256>}, {pipeline_mode = #tpu.pipeline_mode<synchronous>, transform_indices = @transform_8, window_bounds = array<i64: 1, 256>}, {pipeline_mode = #tpu.pipeline_mode<synchronous>, transform_indices = @transform_9, window_bounds = array<i64: 256, 256>}, {pipeline_mode = #tpu.pipeline_mode<synchronous>, transform_indices = @transform_10, window_bounds = array<i64: 1, 256>}, {pipeline_mode = #tpu.pipeline_mode<synchronous>, transform_indices = @transform_11, window_bounds = array<i64: 256, 256>}, {pipeline_mode = #tpu.pipeline_mode<synchronous>, transform_indices = @transform_12, window_bounds = array<i64: 1, 256>}, {pipeline_mode = #tpu.pipeline_mode<synchronous>, transform_indices = @transform_13, window_bounds = array<i64: 256, 3>}, {pipeline_mode = #tpu.pipeline_mode<synchronous>, transform_indices = @transform_14, window_bounds = array<i64: 1, 3>}, {transform_indices = @transform_15, window_bounds = array<i64: 8, 3>}]} {
    %c0 = arith.constant 0 : index
    %c0_0 = arith.constant 0 : index
    %0 = vector.load %arg2[%c0, %c0_0] : memref<2x128xf32, #tpu.memory_space<vmem>>, vector<1x128xf32>
    %c1 = arith.constant 1 : index
    %c0_1 = arith.constant 0 : index
    %1 = vector.load %arg2[%c1, %c0_1] : memref<2x128xf32, #tpu.memory_space<vmem>>, vector<1x128xf32>
    %c0_2 = arith.constant 0 : index
    %c0_3 = arith.constant 0 : index
    %2 = vector.load %arg3[%c0_2, %c0_3] : memref<1x128xf32, #tpu.memory_space<vmem>>, vector<1x128xf32>
    %c0_4 = arith.constant 0 : index
    %c0_5 = arith.constant 0 : index
    %3 = vector.load %arg1[%c0_4, %c0_5] : memref<8x2xf32, #tpu.memory_space<vmem>>, vector<8x2xf32>
    %4 = vector.extract_strided_slice %3 {offsets = [0, 0], sizes = [8, 1], strides = [1, 1]} : vector<8x2xf32> to vector<8x1xf32>
    %5 = vector.broadcast %4 : vector<8x1xf32> to vector<8x128xf32>
    %6 = vector.broadcast %0 : vector<1x128xf32> to vector<8x128xf32>
    %7 = arith.mulf %5, %6 : vector<8x128xf32>
    %8 = vector.extract_strided_slice %3 {offsets = [0, 1], sizes = [8, 1], strides = [1, 1]} : vector<8x2xf32> to vector<8x1xf32>
    %9 = vector.broadcast %8 : vector<8x1xf32> to vector<8x128xf32>
    %10 = vector.broadcast %1 : vector<1x128xf32> to vector<8x128xf32>
    %11 = arith.mulf %9, %10 : vector<8x128xf32>
    %12 = arith.addf %7, %11 : vector<8x128xf32>
    %13 = vector.broadcast %2 : vector<1x128xf32> to vector<8x128xf32>
    %14 = arith.addf %12, %13 : vector<8x128xf32>
    %15 = math.sin %14 : vector<8x128xf32>
    %16 = arith.truncf %15 : vector<8x128xf32> to vector<8x128xbf16>
    %c0_6 = arith.constant 0 : index
    %c0_7 = arith.constant 0 : index
    %17 = vector.load %arg4[%c0_6, %c0_7] : memref<128x256xbf16, #tpu.memory_space<vmem>>, vector<128x256xbf16>
    %c0_8 = arith.constant 0 : index
    %c0_9 = arith.constant 0 : index
    %18 = vector.load %arg5[%c0_8, %c0_9] : memref<1x256xf32, #tpu.memory_space<vmem>>, vector<1x256xf32>
    %cst = arith.constant dense<0.000000e+00> : vector<8x256xf32>
    %19 = tpu.matmul %16, %17, %cst {dimension_numbers = #tpu.dot_dimension_numbers<[1], [0], [0], [1], [0, 0, 1, 1], [], []>} : vector<8x128xbf16>, vector<128x256xbf16>, vector<8x256xf32> -> vector<8x256xf32>
    %20 = vector.broadcast %18 : vector<1x256xf32> to vector<8x256xf32>
    %21 = arith.addf %19, %20 : vector<8x256xf32>
    %cst_10 = arith.constant 0.000000e+00 : f32
    %22 = vector.broadcast %cst_10 : f32 to vector<8x256xf32>
    %23 = arith.maximumf %21, %22 : vector<8x256xf32>
    %24 = arith.truncf %23 : vector<8x256xf32> to vector<8x256xbf16>
    %c0_11 = arith.constant 0 : index
    %c0_12 = arith.constant 0 : index
    %25 = vector.load %arg6[%c0_11, %c0_12] : memref<256x256xbf16, #tpu.memory_space<vmem>>, vector<256x256xbf16>
    %c0_13 = arith.constant 0 : index
    %c0_14 = arith.constant 0 : index
    %26 = vector.load %arg7[%c0_13, %c0_14] : memref<1x256xf32, #tpu.memory_space<vmem>>, vector<1x256xf32>
    %cst_15 = arith.constant dense<0.000000e+00> : vector<8x256xf32>
    %27 = tpu.matmul %24, %25, %cst_15 {dimension_numbers = #tpu.dot_dimension_numbers<[1], [0], [0], [1], [0, 0, 1, 1], [], []>} : vector<8x256xbf16>, vector<256x256xbf16>, vector<8x256xf32> -> vector<8x256xf32>
    %28 = vector.broadcast %26 : vector<1x256xf32> to vector<8x256xf32>
    %29 = arith.addf %27, %28 : vector<8x256xf32>
    %cst_16 = arith.constant 0.000000e+00 : f32
    %30 = vector.broadcast %cst_16 : f32 to vector<8x256xf32>
    %31 = arith.maximumf %29, %30 : vector<8x256xf32>
    %32 = arith.truncf %31 : vector<8x256xf32> to vector<8x256xbf16>
    %c0_17 = arith.constant 0 : index
    %c0_18 = arith.constant 0 : index
    %33 = vector.load %arg8[%c0_17, %c0_18] : memref<256x256xbf16, #tpu.memory_space<vmem>>, vector<256x256xbf16>
    %c0_19 = arith.constant 0 : index
    %c0_20 = arith.constant 0 : index
    %34 = vector.load %arg9[%c0_19, %c0_20] : memref<1x256xf32, #tpu.memory_space<vmem>>, vector<1x256xf32>
    %cst_21 = arith.constant dense<0.000000e+00> : vector<8x256xf32>
    %35 = tpu.matmul %32, %33, %cst_21 {dimension_numbers = #tpu.dot_dimension_numbers<[1], [0], [0], [1], [0, 0, 1, 1], [], []>} : vector<8x256xbf16>, vector<256x256xbf16>, vector<8x256xf32> -> vector<8x256xf32>
    %36 = vector.broadcast %34 : vector<1x256xf32> to vector<8x256xf32>
    %37 = arith.addf %35, %36 : vector<8x256xf32>
    %cst_22 = arith.constant 0.000000e+00 : f32
    %38 = vector.broadcast %cst_22 : f32 to vector<8x256xf32>
    %39 = arith.maximumf %37, %38 : vector<8x256xf32>
    %40 = arith.truncf %39 : vector<8x256xf32> to vector<8x256xbf16>
    %c0_23 = arith.constant 0 : index
    %c0_24 = arith.constant 0 : index
    %41 = vector.load %arg10[%c0_23, %c0_24] : memref<256x256xbf16, #tpu.memory_space<vmem>>, vector<256x256xbf16>
    %c0_25 = arith.constant 0 : index
    %c0_26 = arith.constant 0 : index
    %42 = vector.load %arg11[%c0_25, %c0_26] : memref<1x256xf32, #tpu.memory_space<vmem>>, vector<1x256xf32>
    %cst_27 = arith.constant dense<0.000000e+00> : vector<8x256xf32>
    %43 = tpu.matmul %40, %41, %cst_27 {dimension_numbers = #tpu.dot_dimension_numbers<[1], [0], [0], [1], [0, 0, 1, 1], [], []>} : vector<8x256xbf16>, vector<256x256xbf16>, vector<8x256xf32> -> vector<8x256xf32>
    %44 = vector.broadcast %42 : vector<1x256xf32> to vector<8x256xf32>
    %45 = arith.addf %43, %44 : vector<8x256xf32>
    %cst_28 = arith.constant 0.000000e+00 : f32
    %46 = vector.broadcast %cst_28 : f32 to vector<8x256xf32>
    %47 = arith.maximumf %45, %46 : vector<8x256xf32>
    %48 = arith.truncf %47 : vector<8x256xf32> to vector<8x256xbf16>
    %c0_29 = arith.constant 0 : index
    %c0_30 = arith.constant 0 : index
    %49 = vector.load %arg12[%c0_29, %c0_30] : memref<256x256xbf16, #tpu.memory_space<vmem>>, vector<256x256xbf16>
    %c0_31 = arith.constant 0 : index
    %c0_32 = arith.constant 0 : index
    %50 = vector.load %arg13[%c0_31, %c0_32] : memref<1x256xf32, #tpu.memory_space<vmem>>, vector<1x256xf32>
    %cst_33 = arith.constant dense<0.000000e+00> : vector<8x256xf32>
    %51 = tpu.matmul %48, %49, %cst_33 {dimension_numbers = #tpu.dot_dimension_numbers<[1], [0], [0], [1], [0, 0, 1, 1], [], []>} : vector<8x256xbf16>, vector<256x256xbf16>, vector<8x256xf32> -> vector<8x256xf32>
    %52 = vector.broadcast %50 : vector<1x256xf32> to vector<8x256xf32>
    %53 = arith.addf %51, %52 : vector<8x256xf32>
    %cst_34 = arith.constant 0.000000e+00 : f32
    %54 = vector.broadcast %cst_34 : f32 to vector<8x256xf32>
    %55 = arith.maximumf %53, %54 : vector<8x256xf32>
    %56 = arith.truncf %55 : vector<8x256xf32> to vector<8x256xbf16>
    %c0_35 = arith.constant 0 : index
    %c0_36 = arith.constant 0 : index
    %57 = vector.load %arg14[%c0_35, %c0_36] : memref<256x3xbf16, #tpu.memory_space<vmem>>, vector<256x3xbf16>
    %c0_37 = arith.constant 0 : index
    %c0_38 = arith.constant 0 : index
    %58 = vector.load %arg15[%c0_37, %c0_38] : memref<1x3xf32, #tpu.memory_space<vmem>>, vector<1x3xf32>
    %cst_39 = arith.constant dense<0.000000e+00> : vector<8x3xf32>
    %59 = tpu.matmul %56, %57, %cst_39 {dimension_numbers = #tpu.dot_dimension_numbers<[1], [0], [0], [1], [0, 0, 1, 1], [], []>} : vector<8x256xbf16>, vector<256x3xbf16>, vector<8x3xf32> -> vector<8x3xf32>
    %60 = vector.broadcast %58 : vector<1x3xf32> to vector<8x3xf32>
    %61 = arith.addf %59, %60 : vector<8x3xf32>
    %62 = arith.negf %61 : vector<8x3xf32>
    %63 = math.exp %62 : vector<8x3xf32>
    %cst_40 = arith.constant 1.000000e+00 : f32
    %64 = vector.broadcast %cst_40 : f32 to vector<8x3xf32>
    %65 = arith.addf %64, %63 : vector<8x3xf32>
    %66 = arith.divf %64, %65 : vector<8x3xf32>
    %c0_41 = arith.constant 0 : index
    %c0_42 = arith.constant 0 : index
    %67 = vector.load %arg16[%c0_41, %c0_42] : memref<8x3xf32, #tpu.memory_space<vmem>>, vector<8x3xf32>
    tpu.vector_store %arg16[%c0_41, %c0_42], %66 {strides = array<i32>} : memref<8x3xf32, #tpu.memory_space<vmem>>, vector<8x3xf32>,
    return
  }
  func.func @transform_0(%arg0: i32) -> (i32, i32) {
    %c0_i32 = arith.constant 0 : i32
    %c0_i32_0 = arith.constant 0 : i32
    return %arg0, %c0_i32 : i32, i32
  }
  func.func @transform_1(%arg0: i32) -> (i32, i32) {
    %c0_i32 = arith.constant 0 : i32
    %c0_i32_0 = arith.constant 0 : i32
    %c0_i32_1 = arith.constant 0 : i32
    return %c0_i32, %c0_i32_0 : i32, i32
  }
  func.func @transform_2(%arg0: i32) -> (i32, i32) {
    %c0_i32 = arith.constant 0 : i32
    %c0_i32_0 = arith.constant 0 : i32
    %c0_i32_1 = arith.constant 0 : i32
    return %c0_i32, %c0_i32_0 : i32, i32
  }
  func.func @transform_3(%arg0: i32) -> (i32, i32) {
    %c0_i32 = arith.constant 0 : i32
    %c0_i32_0 = arith.constant 0 : i32
    %c0_i32_1 = arith.constant 0 : i32
    return %c0_i32, %c0_i32_0 : i32, i32
  }
  func.func @transform_4(%arg0: i32) -> (i32, i32) {
    %c0_i32 = arith.constant 0 : i32
    %c0_i32_0 = arith.constant 0 : i32
    %c0_i32_1 = arith.constant 0 : i32
    return %c0_i32, %c0_i32_0 : i32, i32
  }
  func.func @transform_5(%arg0: i32) -> (i32, i32) {
    %c0_i32 = arith.constant 0 : i32
    %c0_i32_0 = arith.constant 0 : i32
    %c0_i32_1 = arith.constant 0 : i32
    return %c0_i32, %c0_i32_0 : i32, i32
  }
  func.func @transform_6(%arg0: i32) -> (i32, i32) {
    %c0_i32 = arith.constant 0 : i32
    %c0_i32_0 = arith.constant 0 : i32
    %c0_i32_1 = arith.constant 0 : i32
    return %c0_i32, %c0_i32_0 : i32, i32
  }
  func.func @transform_7(%arg0: i32) -> (i32, i32) {
    %c0_i32 = arith.constant 0 : i32
    %c0_i32_0 = arith.constant 0 : i32
    %c0_i32_1 = arith.constant 0 : i32
    return %c0_i32, %c0_i32_0 : i32, i32
  }
  func.func @transform_8(%arg0: i32) -> (i32, i32) {
    %c0_i32 = arith.constant 0 : i32
    %c0_i32_0 = arith.constant 0 : i32
    %c0_i32_1 = arith.constant 0 : i32
    return %c0_i32, %c0_i32_0 : i32, i32
  }
  func.func @transform_9(%arg0: i32) -> (i32, i32) {
    %c0_i32 = arith.constant 0 : i32
    %c0_i32_0 = arith.constant 0 : i32
    %c0_i32_1 = arith.constant 0 : i32
    return %c0_i32, %c0_i32_0 : i32, i32
  }
  func.func @transform_10(%arg0: i32) -> (i32, i32) {
    %c0_i32 = arith.constant 0 : i32
    %c0_i32_0 = arith.constant 0 : i32
    %c0_i32_1 = arith.constant 0 : i32
    return %c0_i32, %c0_i32_0 : i32, i32
  }
  func.func @transform_11(%arg0: i32) -> (i32, i32) {
    %c0_i32 = arith.constant 0 : i32
    %c0_i32_0 = arith.constant 0 : i32
    %c0_i32_1 = arith.constant 0 : i32
    return %c0_i32, %c0_i32_0 : i32, i32
  }
  func.func @transform_12(%arg0: i32) -> (i32, i32) {
    %c0_i32 = arith.constant 0 : i32
    %c0_i32_0 = arith.constant 0 : i32
    %c0_i32_1 = arith.constant 0 : i32
    return %c0_i32, %c0_i32_0 : i32, i32
  }
  func.func @transform_13(%arg0: i32) -> (i32, i32) {
    %c0_i32 = arith.constant 0 : i32
    %c0_i32_0 = arith.constant 0 : i32
    %c0_i32_1 = arith.constant 0 : i32
    return %c0_i32, %c0_i32_0 : i32, i32
  }
  func.func @transform_14(%arg0: i32) -> (i32, i32) {
    %c0_i32 = arith.constant 0 : i32
    %c0_i32_0 = arith.constant 0 : i32
    %c0_i32_1 = arith.constant 0 : i32
    return %c0_i32, %c0_i32_0 : i32, i32
  }
  func.func @transform_15(%arg0: i32) -> (i32, i32) {
    %c0_i32 = arith.constant 0 : i32
    %c0_i32_0 = arith.constant 0 : i32
    return %arg0, %c0_i32 : i32, i32
  }
}

</mosaic_0001>

<llo_original>
// kernel: tpu_custom_call.1
$region0: #{tpu_custom_call.1}
  #allocation0 [shape = 'u32[]', space=smem, size = 0x4, offset = 0x4, fixed_abs, tag = 'smem constant byte address 0x4 - core index']
  #allocation1 [shape = 'u32[144,128]{1,0:T(1,128)}', space=vmem, size = 0x12000, scoped, tag = 'internal scratch']
  %s0 = inlined_call_operand.vmem [shape: f32[8,2], index: 0, kind: input, shape index: {}]
  %s1 = inlined_call_operand.vmem [shape: f32[2,128], index: 1, kind: input, shape index: {}]
  %s2 = inlined_call_operand.vmem [shape: f32[1,128], index: 2, kind: input, shape index: {}]
  %s3 = inlined_call_operand.vmem [shape: bf16[128,256], index: 3, kind: input, shape index: {}]
  %s4 = inlined_call_operand.vmem [shape: f32[1,256], index: 4, kind: input, shape index: {}]
  %s5 = inlined_call_operand.hbm [shape: bf16[256,256], index: 5, kind: input, shape index: {}]
  %s6 = inlined_call_operand.vmem [shape: f32[1,256], index: 6, kind: input, shape index: {}]
  %s7 = inlined_call_operand.hbm [shape: bf16[256,256], index: 7, kind: input, shape index: {}]
  %s8 = inlined_call_operand.vmem [shape: f32[1,256], index: 8, kind: input, shape index: {}]
  %s9 = inlined_call_operand.hbm [shape: bf16[256,256], index: 9, kind: input, shape index: {}]
  %s10 = inlined_call_operand.vmem [shape: f32[1,256], index: 10, kind: input, shape index: {}]
  %s11 = inlined_call_operand.hbm [shape: bf16[256,256], index: 11, kind: input, shape index: {}]
  %s12 = inlined_call_operand.vmem [shape: f32[1,256], index: 12, kind: input, shape index: {}]
  %s13 = inlined_call_operand.vmem [shape: bf16[256,3], index: 13, kind: input, shape index: {}]
  %s14 = inlined_call_operand.vmem [shape: f32[1,3], index: 14, kind: input, shape index: {}]
  %s15 = inlined_call_operand.vmem [shape: f32[8,3], index: 15, kind: output, shape index: {}]
  %s16 = sld [smem:[#allocation0]]
  $region86: #{tpu_custom_call.1} parent=0
    _
  %s18 = ssub.s32 1, %s16
  %s19 = scalar_select 0, %s18, %s16
  $region1: #{tpu_custom_call.1} parent=0
    #allocation2 [shape = 'u8[131072]{0}', space=vmem, size = 0x20000, scoped, tag = 'input window, operand 5, single buffered']
    #allocation3 [shape = 's32[1]{0}', space=sflag, size = 0x4, scoped, tag = 'scoped memory for tpu_custom_call.1']
    #allocation4 [shape = 'u8[131072]{0}', space=vmem, size = 0x20000, scoped, tag = 'input window, operand 7, single buffered']
    #allocation5 [shape = 's32[1]{0}', space=sflag, size = 0x4, scoped, tag = 'scoped memory for tpu_custom_call.1']
    #allocation6 [shape = 'u8[131072]{0}', space=vmem, size = 0x20000, scoped, tag = 'input window, operand 9, single buffered']
    #allocation7 [shape = 'u8[131072]{0}', space=vmem, size = 0x20000, scoped, tag = 'input window, operand 11, single buffered']
    #allocation8 [shape = 's32[1]{0}', space=sflag, size = 0x4, scoped, tag = 'scoped memory for tpu_custom_call.1']
    %20 = vsyncpa [#allocation3], 0
    %21 = vsyncpa [#allocation5], 0
    %22 = vsyncpa [#allocation8], 0
    // Predicated region
    $region2: #{tpu_custom_call.1} parent=1 // pred_check
      _
    $region3: #{tpu_custom_call.1} parent=1 // pred_check_branch
      %24 = sbr.rel (0) target = $region5
    $region4: #{tpu_custom_call.1} parent=1 // pred_region
      _
    $region5: #{tpu_custom_call.1} parent=1 // pred_fallthru
      _
    // Predicated region
    $region6: #{tpu_custom_call.1} parent=1 // pred_check
      _
    $region7: #{tpu_custom_call.1} parent=1 // pred_check_branch
      %26 = sbr.rel (0) target = $region9
    $region8: #{tpu_custom_call.1} parent=1 // pred_region
      _
    $region9: #{tpu_custom_call.1} parent=1 // pred_fallthru
      _
    // Predicated region
    $region10: #{tpu_custom_call.1} parent=1 // pred_check
      _
    $region11: #{tpu_custom_call.1} parent=1 // pred_check_branch
      %28 = sbr.rel (0) target = $region13
    $region12: #{tpu_custom_call.1} parent=1 // pred_region
      _
    $region13: #{tpu_custom_call.1} parent=1 // pred_fallthru
      _
    // Predicated region
    $region14: #{tpu_custom_call.1} parent=1 // pred_check
      _
    $region15: #{tpu_custom_call.1} parent=1 // pred_check_branch
      %30 = sbr.rel (0) target = $region17
    $region16: #{tpu_custom_call.1} parent=1 // pred_region
      _
    $region17: #{tpu_custom_call.1} parent=1 // pred_fallthru
      _
    // Predicated region
    $region18: #{tpu_custom_call.1} parent=1 // pred_check
      _
    $region19: #{tpu_custom_call.1} parent=1 // pred_check_branch
      %32 = sbr.rel (0) target = $region21
    $region20: #{tpu_custom_call.1} parent=1 // pred_region
      _
    $region21: #{tpu_custom_call.1} parent=1 // pred_fallthru
      _
    // Predicated region
    $region22: #{tpu_custom_call.1} parent=1 // pred_check
      _
    $region23: #{tpu_custom_call.1} parent=1 // pred_check_branch
      %34 = sbr.rel (0) target = $region25
    $region24: #{tpu_custom_call.1} parent=1 // pred_region
      %s36 = ssub.s32 4096, 4096
      %37 = vsyncadd [#allocation3], %s36
      %s38 = sshll.u32 [#allocation2], 4
      %s39 = int_to_ptr.vmem [resolvable:$true] %s38
      %44 = dma.hbm_to_vmem [thread:$0]  %s5, 4096, %s39, [#allocation3], 128, 128, 8
    $region25: #{tpu_custom_call.1} parent=1 // pred_fallthru
      _
    // Predicated region
    $region26: #{tpu_custom_call.1} parent=1 // pred_check
      _
    $region27: #{tpu_custom_call.1} parent=1 // pred_check_branch
      %46 = sbr.rel (0) target = $region29
    $region28: #{tpu_custom_call.1} parent=1 // pred_region
      _
    $region29: #{tpu_custom_call.1} parent=1 // pred_fallthru
      _
    // Predicated region
    $region30: #{tpu_custom_call.1} parent=1 // pred_check
      _
    $region31: #{tpu_custom_call.1} parent=1 // pred_check_branch
      %48 = sbr.rel (0) target = $region33
    $region32: #{tpu_custom_call.1} parent=1 // pred_region
      %s50 = ssub.s32 4096, 4096
      %51 = vsyncadd [#allocation5], %s50
      %s52 = sshll.u32 [#allocation4], 4
      %s53 = int_to_ptr.vmem [resolvable:$true] %s52
      %58 = dma.hbm_to_vmem [thread:$0]  %s7, 4096, %s53, [#allocation5], 128, 128, 8
    $region33: #{tpu_custom_call.1} parent=1 // pred_fallthru
      _
    // Predicated region
    $region34: #{tpu_custom_call.1} parent=1 // pred_check
      _
    $region35: #{tpu_custom_call.1} parent=1 // pred_check_branch
      %60 = sbr.rel (0) target = $region37
    $region36: #{tpu_custom_call.1} parent=1 // pred_region
      _
    $region37: #{tpu_custom_call.1} parent=1 // pred_fallthru
      _
    // Predicated region
    $region38: #{tpu_custom_call.1} parent=1 // pred_check
      _
    $region39: #{tpu_custom_call.1} parent=1 // pred_check_branch
      %62 = sbr.rel (0) target = $region41
    $region40: #{tpu_custom_call.1} parent=1 // pred_region
      %s64 = ssub.s32 4096, 4096
      %65 = vsyncadd [#allocation5], %s64
      %s66 = sshll.u32 [#allocation6], 4
      %s67 = int_to_ptr.vmem [resolvable:$true] %s66
      %72 = dma.hbm_to_vmem [thread:$0]  %s9, 4096, %s67, [#allocation5], 128, 128, 8
    $region41: #{tpu_custom_call.1} parent=1 // pred_fallthru
      _
    // Predicated region
    $region42: #{tpu_custom_call.1} parent=1 // pred_check
      _
    $region43: #{tpu_custom_call.1} parent=1 // pred_check_branch
      %74 = sbr.rel (0) target = $region45
    $region44: #{tpu_custom_call.1} parent=1 // pred_region
      _
    $region45: #{tpu_custom_call.1} parent=1 // pred_fallthru
      _
    // Predicated region
    $region46: #{tpu_custom_call.1} parent=1 // pred_check
      _
    $region47: #{tpu_custom_call.1} parent=1 // pred_check_branch
      %76 = sbr.rel (0) target = $region49
    $region48: #{tpu_custom_call.1} parent=1 // pred_region
      %s78 = ssub.s32 4096, 4096
      %79 = vsyncadd [#allocation8], %s78
      %s80 = sshll.u32 [#allocation7], 4
      %s81 = int_to_ptr.vmem [resolvable:$true] %s80
      %86 = dma.hbm_to_vmem [thread:$0]  %s11, 4096, %s81, [#allocation8], 128, 128, 8
    $region49: #{tpu_custom_call.1} parent=1 // pred_fallthru
      _
    // Predicated region
    $region50: #{tpu_custom_call.1} parent=1 // pred_check
      _
    $region51: #{tpu_custom_call.1} parent=1 // pred_check_branch
      %88 = sbr.rel (0) target = $region53
    $region52: #{tpu_custom_call.1} parent=1 // pred_region
      _
    $region53: #{tpu_custom_call.1} parent=1 // pred_fallthru
      _
    // Predicated region
    $region54: #{tpu_custom_call.1} parent=1 // pred_check
      _
    $region55: #{tpu_custom_call.1} parent=1 // pred_check_branch
      %90 = sbr.rel (0) target = $region57
    $region56: #{tpu_custom_call.1} parent=1 // pred_region
      _
    $region57: #{tpu_custom_call.1} parent=1 // pred_fallthru
      _
    // Predicated region
    $region58: #{tpu_custom_call.1} parent=1 // pred_check
      _
    $region59: #{tpu_custom_call.1} parent=1 // pred_check_branch
      %92 = sbr.rel (0) target = $region61
    $region60: #{tpu_custom_call.1} parent=1 // pred_region
      _
    $region61: #{tpu_custom_call.1} parent=1 // pred_fallthru
      _
    // Predicated region
    $region62: #{tpu_custom_call.1} parent=1 // pred_check
      _
    $region63: #{tpu_custom_call.1} parent=1 // pred_check_branch
      %94 = sbr.rel (0) target = $region65
    $region64: #{tpu_custom_call.1} parent=1 // pred_region
      %95 = dma.done [#allocation3], 4096
    $region65: #{tpu_custom_call.1} parent=1 // pred_fallthru
      _
    // Predicated region
    $region66: #{tpu_custom_call.1} parent=1 // pred_check
      _
    $region67: #{tpu_custom_call.1} parent=1 // pred_check_branch
      %97 = sbr.rel (0) target = $region69
    $region68: #{tpu_custom_call.1} parent=1 // pred_region
      %98 = dma.done [#allocation5], 4096
    $region69: #{tpu_custom_call.1} parent=1 // pred_fallthru
      _
    // Predicated region
    $region70: #{tpu_custom_call.1} parent=1 // pred_check
      _
    $region71: #{tpu_custom_call.1} parent=1 // pred_check_branch
      %100 = sbr.rel (0) target = $region73
    $region72: #{tpu_custom_call.1} parent=1 // pred_region
      %101 = dma.done [#allocation5], 4096
    $region73: #{tpu_custom_call.1} parent=1 // pred_fallthru
      _
    // Predicated region
    $region74: #{tpu_custom_call.1} parent=1 // pred_check
      _
    $region75: #{tpu_custom_call.1} parent=1 // pred_check_branch
      %103 = sbr.rel (0) target = $region77
    $region76: #{tpu_custom_call.1} parent=1 // pred_region
      %104 = dma.done [#allocation8], 4096
    $region77: #{tpu_custom_call.1} parent=1 // pred_fallthru
      _
    %v106 = vld [vmem:[%s1] sm:$0x1]
    %v107 = vld [vmem:[%s1 + $0x1] sm:$0x1]
    %v108 = vld [vmem:[%s2] sm:$0x1]
    %v109 = vld [vmem:[%s0] sm:$0xff]
    %111 = vset.pattern.permute.xlu0 0
    %112 = vperm.xlu0 %111, %v109
    %v113 = vpop.permute.xlu0 %112
    %v115 = vlaneseq
    %v116 = vshrl.u32 %v115, 7
    %v117 = vsub.s32 0, %v116
    %v118 = vrot.slane %v106, %v117
    %v119 = vmul.f32 %v113, %v118
    %120 = vset.pattern.permute.xlu0 1
    %121 = vperm.xlu0 %120, %v109
    %v122 = vpop.permute.xlu0 %121
    %v124 = vlaneseq
    %v125 = vshrl.u32 %v124, 7
    %v126 = vsub.s32 0, %v125
    %v127 = vrot.slane %v107, %v126
    %v128 = vmul.f32 %v122, %v127
    %v129 = vadd.f32 %v119, %v128
    %v131 = vlaneseq
    %v132 = vshrl.u32 %v131, 7
    %v133 = vsub.s32 0, %v132
    %v134 = vrot.slane %v108, %v133
    %v136 = vadd.f32 %v129, %v134
    %v137 = vand.u32 2147483647, %v136
    %vm138 = vcmp.le.f32.partialorder %v137, 0.7853982
    %vm139 = vcmp.lt.s32.totalorder %v136, 0
    %v140 = vand.u32 %v136, 2139095040
    %v141 = vshrl.u32 %v140, 23
    %v142 = vsub.s32 %v141, 127
    %v143 = vand.u32 2147483647, %v136
    %v144 = vand.u32 %v143, 8388607
    %v145 = vor.u32 %v144, 8388608
    %v146 = vsub.s32 0, %v145
    %v147 = vadd.s32 %v142, 1
    %vm148 = vcmp.gt.s32.totalorder %v147, 0
    %v149 = vsel %vm148, %v147, 0
    %v150 = vshrl.u32 %v149, 5
    %v151 = vand.u32 %v149, 31
    %v152 = vsub.s32 32, %v151
    %v153 = vshrl.u32 683565275, %v152
    %v154 = vshll.u32 683565275, %v151
    %v155 = vshrl.u32 2475754826, %v152
    %v156 = vor.u32 %v154, %v155
    %v157 = vshll.u32 2475754826, %v151
    %v158 = vshrl.u32 2131351028, %v152
    %v159 = vor.u32 %v157, %v158
    %v160 = vshll.u32 2131351028, %v151
    %v161 = vshrl.u32 2102212464, %v152
    %v162 = vor.u32 %v160, %v161
    %v163 = vshll.u32 2102212464, %v151
    %v164 = vshrl.u32 920167782, %v152
    %v165 = vor.u32 %v163, %v164
    %v166 = vshll.u32 920167782, %v151
    %v167 = vshrl.u32 1326507024, %v152
    %v168 = vor.u32 %v166, %v167
    %vm169 = vcmp.lt.s32.totalorder %v150, 1
    %vm170 = vcmp.lt.s32.totalorder %v150, 2
    %vm171 = vcmp.lt.s32.totalorder %v150, 3
    %vm172 = vcmp.lt.s32.totalorder %v150, 4
    %v173 = vsel %vm169, %v153, %v156
    %v174 = vsel %vm172, %v162, 2102212464
    %v175 = vsel %vm171, %v159, %v174
    %v176 = vsel %vm170, %v173, %v175
    %v177 = vsel %vm169, %v156, %v159
    %v178 = vsel %vm172, %v165, 920167782
    %v179 = vsel %vm171, %v162, %v178
    %v180 = vsel %vm170, %v177, %v179
    %v181 = vsel %vm169, %v159, %v162
    %v182 = vsel %vm172, %v168, 1326507024
    %v183 = vsel %vm171, %v165, %v182
    %v184 = vsel %vm170, %v181, %v183
    %v185 = vshll.u32 %v145, 8
    %v186 = vmul.u32.u64.compose %v185, %v184
    %v187 = vextract.low.u32 %v186
    %v188 = vextract.high.u32 %v186
    %v189 = vmul.u32.u64.compose %v185, %v180
    %v190 = vextract.low.u32 %v189
    %v191 = vextract.high.u32 %v189
    %v192 = vmul.u32 %v185, %v176
    %v193 = vadd.s32 %v188, %v190
    %vm194 = vc.u32 %v188, %v190
    %v195 = vadd.s32 %v191, 1
    %v196 = vsel %vm194, %v195, %v191
    %v197 = vadd.s32 %v192, %v196
    %v198 = vadd.s32 %v197, 536870912
    %v199 = vshrl.u32 %v198, 30
    %v200 = vshll.u32 %v199, 30
    %v201 = vsub.s32 %v197, %v200
    %vm202 = vcmp.lt.s32.totalorder %v201, 0
    %v203 = vsub.s32 0, %v201
    %v204 = vsel %vm202, %v203, %v201
    %v205 = vclz %v204
    %v206 = vsub.s32 %v205, 2
    %vm207 = vcmp.gt.s32.totalorder 0, %v206
    %v208 = vsel %vm207, 0, %v206
    %v209 = vsub.s32 32, %v208
    %v210 = vshll.u32 %v201, %v208
    %v211 = vshrl.u32 %v193, %v209
    %v212 = vor.u32 %v210, %v211
    %v213 = vsub.s32 4294967266, %v208
    %v214 = vadd.s32 %v213, 127
    %v215 = vshll.u32 %v214, 23
    %v216 = vor.u32 4788187, %v215
    %v217 = vand.u32 2147483647, %v216
    %v219 = vcvt.s32.f32 %v212
    %v220 = vmul.f32 %v219, %v217
    %v221 = vxor.u32 %v220, 2147483648
    %v222 = vsel %vm139, %v221, %v220
    %v223 = vsub.s32 4, %v199
    %v224 = vsel %vm139, %v223, %v199
    %v225 = vsel %vm138, %v136, %v222
    %v226 = vsel %vm138, 0, %v224
    %v227 = vcosq.f32.pop %v225
    %v228 = vsinq.f32.pop %v225
    %vm229 = vweird.f32 %v136
    %v230 = vadd.s32 %v226, 3
    %v231 = vand.u32 %v230, 3
    %vm232 = vcmp.lt.s32.totalorder %v231, 2
    %vm233 = vcmp.eq.s32.totalorder %v231, 0
    %v234 = vxor.u32 %v228, 2147483648
    %v235 = vsel %vm233, %v227, %v234
    %vm236 = vcmp.eq.s32.totalorder %v231, 2
    %v237 = vxor.u32 %v227, 2147483648
    %v238 = vsel %vm236, %v237, %v228
    %v239 = vsel %vm232, %v235, %v238
    %v240 = vsel %vm229, nan, %v239
    %v241 = vpack.c.bf16 %v240, %v240
    %v242 = vld [vmem:[%s3] sm:$0xff]
    %v243 = vld [vmem:[%s3 + $0x8] sm:$0xff]
    %v244 = vld [vmem:[%s3 + $0x10] sm:$0xff]
    %v245 = vld [vmem:[%s3 + $0x18] sm:$0xff]
    %v246 = vld [vmem:[%s3 + $0x20] sm:$0xff]
    %v247 = vld [vmem:[%s3 + $0x28] sm:$0xff]
    %v248 = vld [vmem:[%s3 + $0x30] sm:$0xff]
    %v249 = vld [vmem:[%s3 + $0x38] sm:$0xff]
    %v250 = vld [vmem:[%s3 + $0x40] sm:$0xff]
    %v251 = vld [vmem:[%s3 + $0x48] sm:$0xff]
    %v252 = vld [vmem:[%s3 + $0x50] sm:$0xff]
    %v253 = vld [vmem:[%s3 + $0x58] sm:$0xff]
    %v254 = vld [vmem:[%s3 + $0x60] sm:$0xff]
    %v255 = vld [vmem:[%s3 + $0x68] sm:$0xff]
    %v256 = vld [vmem:[%s3 + $0x70] sm:$0xff]
    %v257 = vld [vmem:[%s3 + $0x78] sm:$0xff]
    %v258 = vld [vmem:[%s4] sm:$0x3]
    %v260 = vlaneseq
    %v261 = vshrl.u32 %v260, 7
    %v262 = vsub.s32 0, %v261
    %v263 = vrot.slane %v258, %v262
    %v264 = vlaneseq
    %v265 = vshrl.u32 %v264, 7
    %v266 = vsub.s32 1, %v265
    %v267 = vrot.slane %v258, %v266
    %v286 = vunpack.c.l.b16 %v242
    %v287 = vunpack.c.h.b16 %v242
    %v288 = vunpack.c.l.b16 %v243
    %v289 = vunpack.c.h.b16 %v243
    %v290 = vunpack.c.l.b16 %v244
    %v291 = vunpack.c.h.b16 %v244
    %v292 = vunpack.c.l.b16 %v245
    %v293 = vunpack.c.h.b16 %v245
    %v294 = vunpack.c.l.b16 %v246
    %v295 = vunpack.c.h.b16 %v246
    %v296 = vunpack.c.l.b16 %v247
    %v297 = vunpack.c.h.b16 %v247
    %v298 = vunpack.c.l.b16 %v248
    %v299 = vunpack.c.h.b16 %v248
    %v300 = vunpack.c.l.b16 %v249
    %v301 = vunpack.c.h.b16 %v249
    %v302 = vunpack.c.l.b16 %v250
    %v303 = vunpack.c.h.b16 %v250
    %v304 = vunpack.c.l.b16 %v251
    %v305 = vunpack.c.h.b16 %v251
    %v306 = vunpack.c.l.b16 %v252
    %v307 = vunpack.c.h.b16 %v252
    %v308 = vunpack.c.l.b16 %v253
    %v309 = vunpack.c.h.b16 %v253
    %v310 = vunpack.c.l.b16 %v254
    %v311 = vunpack.c.h.b16 %v254
    %v312 = vunpack.c.l.b16 %v255
    %v313 = vunpack.c.h.b16 %v255
    %v314 = vunpack.c.l.b16 %v256
    %v315 = vunpack.c.h.b16 %v256
    %v316 = vunpack.c.l.b16 %v257
    %v317 = vunpack.c.h.b16 %v257
    %v318 = vpack.c.b16 %v288, %v286
    %v319 = vpack.c.b16 %v289, %v287
    %v320 = vpack.c.b16 %v292, %v290
    %v321 = vpack.c.b16 %v293, %v291
    %v322 = vpack.c.b16 %v296, %v294
    %v323 = vpack.c.b16 %v297, %v295
    %v324 = vpack.c.b16 %v300, %v298
    %v325 = vpack.c.b16 %v301, %v299
    %v326 = vpack.c.b16 %v304, %v302
    %v327 = vpack.c.b16 %v305, %v303
    %v328 = vpack.c.b16 %v308, %v306
    %v329 = vpack.c.b16 %v309, %v307
    %v330 = vpack.c.b16 %v312, %v310
    %v331 = vpack.c.b16 %v313, %v311
    %v332 = vpack.c.b16 %v316, %v314
    %v333 = vpack.c.b16 %v317, %v315
    %350 = vmatprep.subr.bf16.mxu0 %v319
    %351 = vmatpush1.bf16.msra.mxu0 %v318
    %352 = vmatprep.subr.bf16.mxu0 %v321
    %353 = vmatpush1.bf16.msra.mxu0 %v320
    %354 = vmatprep.subr.bf16.mxu0 %v323
    %355 = vmatpush1.bf16.msra.mxu0 %v322
    %356 = vmatprep.subr.bf16.mxu0 %v325
    %357 = vmatpush1.bf16.msra.mxu0 %v324
    %358 = vmatprep.subr.bf16.mxu0 %v327
    %359 = vmatpush1.bf16.msra.mxu0 %v326
    %360 = vmatprep.subr.bf16.mxu0 %v329
    %361 = vmatpush1.bf16.msra.mxu0 %v328
    %362 = vmatprep.subr.bf16.mxu0 %v331
    %363 = vmatpush1.bf16.msra.mxu0 %v330
    %364 = vmatprep.subr.bf16.mxu0 %v333
    %365 = vmatpush1.bf16.msra.mxu0 %v332
    %366 = vmatprep.subr.bf16.mxu0 0
    %367 = vmatpush1.bf16.msra.mxu0 0
    %368 = vmatprep.subr.bf16.mxu0 0
    %369 = vmatpush1.bf16.msra.mxu0 0
    %370 = vmatprep.subr.bf16.mxu0 0
    %371 = vmatpush1.bf16.msra.mxu0 0
    %372 = vmatprep.subr.bf16.mxu0 0
    %373 = vmatpush1.bf16.msra.mxu0 0
    %374 = vmatprep.subr.bf16.mxu0 0
    %375 = vmatpush1.bf16.msra.mxu0 0
    %376 = vmatprep.subr.bf16.mxu0 0
    %377 = vmatpush1.bf16.msra.mxu0 0
    %378 = vmatprep.subr.bf16.mxu0 0
    %379 = vmatpush1.bf16.msra.mxu0 0
    %380 = vmatprep.subr.bf16.mxu0 0
    %381 = vmatpush1.bf16.msra.mxu0 0
    %382 = vmatprep.mubr.bf16.mxu0 0
    %383 = vmatmul.mubr.bf16.gmra.mrb[0].mxu0 %v241
    %v384 = vpop.f32.mrb[0].mxu0
    %v385 = vadd.f32 %v263, %v384
    %v386 = vpop.f32.mrb[0].mxu0
    %v387 = vadd.f32 %v267, %v386
    %v388 = vpop.f32.mrb[0].mxu0
    %v389 = vpop.f32.mrb[0].mxu0
    %390 = vdwg.mxu0
    %v391 = vmax.f32 %v385, 0.0
    %v392 = vmax.f32 %v387, 0.0
    %v393 = vpack.c.bf16 %v391, %v391
    %v394 = vpack.c.bf16 %v392, %v392
    %v395 = vld [vmem:[#allocation2] sm:$0xff]
    %v396 = vld [vmem:[#allocation2 + $0x8] sm:$0xff]
    %v397 = vld [vmem:[#allocation2 + $0x10] sm:$0xff]
    %v398 = vld [vmem:[#allocation2 + $0x18] sm:$0xff]
    %v399 = vld [vmem:[#allocation2 + $0x20] sm:$0xff]
    %v400 = vld [vmem:[#allocation2 + $0x28] sm:$0xff]
    %v401 = vld [vmem:[#allocation2 + $0x30] sm:$0xff]
    %v402 = vld [vmem:[#allocation2 + $0x38] sm:$0xff]
    %v403 = vld [vmem:[#allocation2 + $0x40] sm:$0xff]
    %v404 = vld [vmem:[#allocation2 + $0x48] sm:$0xff]
    %v405 = vld [vmem:[#allocation2 + $0x50] sm:$0xff]
    %v406 = vld [vmem:[#allocation2 + $0x58] sm:$0xff]
    %v407 = vld [vmem:[#allocation2 + $0x60] sm:$0xff]
    %v408 = vld [vmem:[#allocation2 + $0x68] sm:$0xff]
    %v409 = vld [vmem:[#allocation2 + $0x70] sm:$0xff]
    %v410 = vld [vmem:[#allocation2 + $0x78] sm:$0xff]
    %v411 = vld [vmem:[#allocation2 + $0x80] sm:$0xff]
    %v412 = vld [vmem:[#allocation2 + $0x88] sm:$0xff]
    %v413 = vld [vmem:[#allocation2 + $0x90] sm:$0xff]
    %v414 = vld [vmem:[#allocation2 + $0x98] sm:$0xff]
    %v415 = vld [vmem:[#allocation2 + $0xa0] sm:$0xff]
    %v416 = vld [vmem:[#allocation2 + $0xa8] sm:$0xff]
    %v417 = vld [vmem:[#allocation2 + $0xb0] sm:$0xff]
    %v418 = vld [vmem:[#allocation2 + $0xb8] sm:$0xff]
    %v419 = vld [vmem:[#allocation2 + $0xc0] sm:$0xff]
    %v420 = vld [vmem:[#allocation2 + $0xc8] sm:$0xff]
    %v421 = vld [vmem:[#allocation2 + $0xd0] sm:$0xff]
    %v422 = vld [vmem:[#allocation2 + $0xd8] sm:$0xff]
    %v423 = vld [vmem:[#allocation2 + $0xe0] sm:$0xff]
    %v424 = vld [vmem:[#allocation2 + $0xe8] sm:$0xff]
    %v425 = vld [vmem:[#allocation2 + $0xf0] sm:$0xff]
    %v426 = vld [vmem:[#allocation2 + $0xf8] sm:$0xff]
    %v427 = vld [vmem:[%s6] sm:$0x3]
    %v429 = vlaneseq
    %v430 = vshrl.u32 %v429, 7
    %v431 = vsub.s32 0, %v430
    %v432 = vrot.slane %v427, %v431
    %v433 = vlaneseq
    %v434 = vshrl.u32 %v433, 7
    %v435 = vsub.s32 1, %v434
    %v436 = vrot.slane %v427, %v435
    %v471 = vunpack.c.l.b16 %v395
    %v472 = vunpack.c.h.b16 %v395
    %v473 = vunpack.c.l.b16 %v396
    %v474 = vunpack.c.h.b16 %v396
    %v475 = vunpack.c.l.b16 %v397
    %v476 = vunpack.c.h.b16 %v397
    %v477 = vunpack.c.l.b16 %v398
    %v478 = vunpack.c.h.b16 %v398
    %v479 = vunpack.c.l.b16 %v399
    %v480 = vunpack.c.h.b16 %v399
    %v481 = vunpack.c.l.b16 %v400
    %v482 = vunpack.c.h.b16 %v400
    %v483 = vunpack.c.l.b16 %v401
    %v484 = vunpack.c.h.b16 %v401
    %v485 = vunpack.c.l.b16 %v402
    %v486 = vunpack.c.h.b16 %v402
    %v487 = vunpack.c.l.b16 %v403
    %v488 = vunpack.c.h.b16 %v403
    %v489 = vunpack.c.l.b16 %v404
    %v490 = vunpack.c.h.b16 %v404
    %v491 = vunpack.c.l.b16 %v405
    %v492 = vunpack.c.h.b16 %v405
    %v493 = vunpack.c.l.b16 %v406
    %v494 = vunpack.c.h.b16 %v406
    %v495 = vunpack.c.l.b16 %v407
    %v496 = vunpack.c.h.b16 %v407
    %v497 = vunpack.c.l.b16 %v408
    %v498 = vunpack.c.h.b16 %v408
    %v499 = vunpack.c.l.b16 %v409
    %v500 = vunpack.c.h.b16 %v409
    %v501 = vunpack.c.l.b16 %v410
    %v502 = vunpack.c.h.b16 %v410
    %v503 = vunpack.c.l.b16 %v411
    %v504 = vunpack.c.h.b16 %v411
    %v505 = vunpack.c.l.b16 %v412
    %v506 = vunpack.c.h.b16 %v412
    %v507 = vunpack.c.l.b16 %v413
    %v508 = vunpack.c.h.b16 %v413
    %v509 = vunpack.c.l.b16 %v414
    %v510 = vunpack.c.h.b16 %v414
    %v511 = vunpack.c.l.b16 %v415
    %v512 = vunpack.c.h.b16 %v415
    %v513 = vunpack.c.l.b16 %v416
    %v514 = vunpack.c.h.b16 %v416
    %v515 = vunpack.c.l.b16 %v417
    %v516 = vunpack.c.h.b16 %v417
    %v517 = vunpack.c.l.b16 %v418
    %v518 = vunpack.c.h.b16 %v418
    %v519 = vunpack.c.l.b16 %v419
    %v520 = vunpack.c.h.b16 %v419
    %v521 = vunpack.c.l.b16 %v420
    %v522 = vunpack.c.h.b16 %v420
    %v523 = vunpack.c.l.b16 %v421
    %v524 = vunpack.c.h.b16 %v421
    %v525 = vunpack.c.l.b16 %v422
    %v526 = vunpack.c.h.b16 %v422
    %v527 = vunpack.c.l.b16 %v423
    %v528 = vunpack.c.h.b16 %v423
    %v529 = vunpack.c.l.b16 %v424
    %v530 = vunpack.c.h.b16 %v424
    %v531 = vunpack.c.l.b16 %v425
    %v532 = vunpack.c.h.b16 %v425
    %v533 = vunpack.c.l.b16 %v426
    %v534 = vunpack.c.h.b16 %v426
    %v535 = vpack.c.b16 %v473, %v471
    %v536 = vpack.c.b16 %v474, %v472
    %v537 = vpack.c.b16 %v477, %v475
    %v538 = vpack.c.b16 %v478, %v476
    %v539 = vpack.c.b16 %v481, %v479
    %v540 = vpack.c.b16 %v482, %v480
    %v541 = vpack.c.b16 %v485, %v483
    %v542 = vpack.c.b16 %v486, %v484
    %v543 = vpack.c.b16 %v489, %v487
    %v544 = vpack.c.b16 %v490, %v488
    %v545 = vpack.c.b16 %v493, %v491
    %v546 = vpack.c.b16 %v494, %v492
    %v547 = vpack.c.b16 %v497, %v495
    %v548 = vpack.c.b16 %v498, %v496
    %v549 = vpack.c.b16 %v501, %v499
    %v550 = vpack.c.b16 %v502, %v500
    %v551 = vpack.c.b16 %v505, %v503
    %v552 = vpack.c.b16 %v506, %v504
    %v553 = vpack.c.b16 %v509, %v507
    %v554 = vpack.c.b16 %v510, %v508
    %v555 = vpack.c.b16 %v513, %v511
    %v556 = vpack.c.b16 %v514, %v512
    %v557 = vpack.c.b16 %v517, %v515
    %v558 = vpack.c.b16 %v518, %v516
    %v559 = vpack.c.b16 %v521, %v519
    %v560 = vpack.c.b16 %v522, %v520
    %v561 = vpack.c.b16 %v525, %v523
    %v562 = vpack.c.b16 %v526, %v524
    %v563 = vpack.c.b16 %v529, %v527
    %v564 = vpack.c.b16 %v530, %v528
    %v565 = vpack.c.b16 %v533, %v531
    %v566 = vpack.c.b16 %v534, %v532
    %599 = vmatprep.subr.bf16.mxu0 %v536
    %600 = vmatpush1.bf16.msra.mxu0 %v535
    %601 = vmatprep.subr.bf16.mxu0 %v538
    %602 = vmatpush1.bf16.msra.mxu0 %v537
    %603 = vmatprep.subr.bf16.mxu0 %v540
    %604 = vmatpush1.bf16.msra.mxu0 %v539
    %605 = vmatprep.subr.bf16.mxu0 %v542
    %606 = vmatpush1.bf16.msra.mxu0 %v541
    %607 = vmatprep.subr.bf16.mxu0 %v544
    %608 = vmatpush1.bf16.msra.mxu0 %v543
    %609 = vmatprep.subr.bf16.mxu0 %v546
    %610 = vmatpush1.bf16.msra.mxu0 %v545
    %611 = vmatprep.subr.bf16.mxu0 %v548
    %612 = vmatpush1.bf16.msra.mxu0 %v547
    %613 = vmatprep.subr.bf16.mxu0 %v550
    %614 = vmatpush1.bf16.msra.mxu0 %v549
    %615 = vmatprep.subr.bf16.mxu0 %v552
    %616 = vmatpush1.bf16.msra.mxu0 %v551
    %617 = vmatprep.subr.bf16.mxu0 %v554
    %618 = vmatpush1.bf16.msra.mxu0 %v553
    %619 = vmatprep.subr.bf16.mxu0 %v556
    %620 = vmatpush1.bf16.msra.mxu0 %v555
    %621 = vmatprep.subr.bf16.mxu0 %v558
    %622 = vmatpush1.bf16.msra.mxu0 %v557
    %623 = vmatprep.subr.bf16.mxu0 %v560
    %624 = vmatpush1.bf16.msra.mxu0 %v559
    %625 = vmatprep.subr.bf16.mxu0 %v562
    %626 = vmatpush1.bf16.msra.mxu0 %v561
    %627 = vmatprep.subr.bf16.mxu0 %v564
    %628 = vmatpush1.bf16.msra.mxu0 %v563
    %629 = vmatprep.subr.bf16.mxu0 %v566
    %630 = vmatpush1.bf16.msra.mxu0 %v565
    %631 = vmatprep.mubr.bf16.mxu0 %v394
    %632 = vmatmul.mubr.bf16.gmra.mrb[0].mxu0 %v393
    %v633 = vpop.f32.mrb[0].mxu0
    %v634 = vadd.f32 %v432, %v633
    %v635 = vpop.f32.mrb[0].mxu0
    %v636 = vadd.f32 %v436, %v635
    %v637 = vpop.f32.mrb[0].mxu0
    %v638 = vpop.f32.mrb[0].mxu0
    %639 = vdwg.mxu0
    %v640 = vmax.f32 %v634, 0.0
    %v641 = vmax.f32 %v636, 0.0
    %v642 = vpack.c.bf16 %v640, %v640
    %v643 = vpack.c.bf16 %v641, %v641
    %v644 = vld [vmem:[#allocation4] sm:$0xff]
    %v645 = vld [vmem:[#allocation4 + $0x8] sm:$0xff]
    %v646 = vld [vmem:[#allocation4 + $0x10] sm:$0xff]
    %v647 = vld [vmem:[#allocation4 + $0x18] sm:$0xff]
    %v648 = vld [vmem:[#allocation4 + $0x20] sm:$0xff]
    %v649 = vld [vmem:[#allocation4 + $0x28] sm:$0xff]
    %v650 = vld [vmem:[#allocation4 + $0x30] sm:$0xff]
    %v651 = vld [vmem:[#allocation4 + $0x38] sm:$0xff]
    %v652 = vld [vmem:[#allocation4 + $0x40] sm:$0xff]
    %v653 = vld [vmem:[#allocation4 + $0x48] sm:$0xff]
    %v654 = vld [vmem:[#allocation4 + $0x50] sm:$0xff]
    %v655 = vld [vmem:[#allocation4 + $0x58] sm:$0xff]
    %v656 = vld [vmem:[#allocation4 + $0x60] sm:$0xff]
    %v657 = vld [vmem:[#allocation4 + $0x68] sm:$0xff]
    %v658 = vld [vmem:[#allocation4 + $0x70] sm:$0xff]
    %v659 = vld [vmem:[#allocation4 + $0x78] sm:$0xff]
    %v660 = vld [vmem:[#allocation4 + $0x80] sm:$0xff]
    %v661 = vld [vmem:[#allocation4 + $0x88] sm:$0xff]
    %v662 = vld [vmem:[#allocation4 + $0x90] sm:$0xff]
    %v663 = vld [vmem:[#allocation4 + $0x98] sm:$0xff]
    %v664 = vld [vmem:[#allocation4 + $0xa0] sm:$0xff]
    %v665 = vld [vmem:[#allocation4 + $0xa8] sm:$0xff]
    %v666 = vld [vmem:[#allocation4 + $0xb0] sm:$0xff]
    %v667 = vld [vmem:[#allocation4 + $0xb8] sm:$0xff]
    %v668 = vld [vmem:[#allocation4 + $0xc0] sm:$0xff]
    %v669 = vld [vmem:[#allocation4 + $0xc8] sm:$0xff]
    %v670 = vld [vmem:[#allocation4 + $0xd0] sm:$0xff]
    %v671 = vld [vmem:[#allocation4 + $0xd8] sm:$0xff]
    %v672 = vld [vmem:[#allocation4 + $0xe0] sm:$0xff]
    %v673 = vld [vmem:[#allocation4 + $0xe8] sm:$0xff]
    %v674 = vld [vmem:[#allocation4 + $0xf0] sm:$0xff]
    %v675 = vld [vmem:[#allocation4 + $0xf8] sm:$0xff]
    %v676 = vld [vmem:[%s8] sm:$0x3]
    %v678 = vlaneseq
    %v679 = vshrl.u32 %v678, 7
    %v680 = vsub.s32 0, %v679
    %v681 = vrot.slane %v676, %v680
    %v682 = vlaneseq
    %v683 = vshrl.u32 %v682, 7
    %v684 = vsub.s32 1, %v683
    %v685 = vrot.slane %v676, %v684
    %v720 = vunpack.c.l.b16 %v644
    %v721 = vunpack.c.h.b16 %v644
    %v722 = vunpack.c.l.b16 %v645
    %v723 = vunpack.c.h.b16 %v645
    %v724 = vunpack.c.l.b16 %v646
    %v725 = vunpack.c.h.b16 %v646
    %v726 = vunpack.c.l.b16 %v647
    %v727 = vunpack.c.h.b16 %v647
    %v728 = vunpack.c.l.b16 %v648
    %v729 = vunpack.c.h.b16 %v648
    %v730 = vunpack.c.l.b16 %v649
    %v731 = vunpack.c.h.b16 %v649
    %v732 = vunpack.c.l.b16 %v650
    %v733 = vunpack.c.h.b16 %v650
    %v734 = vunpack.c.l.b16 %v651
    %v735 = vunpack.c.h.b16 %v651
    %v736 = vunpack.c.l.b16 %v652
    %v737 = vunpack.c.h.b16 %v652
    %v738 = vunpack.c.l.b16 %v653
    %v739 = vunpack.c.h.b16 %v653
    %v740 = vunpack.c.l.b16 %v654
    %v741 = vunpack.c.h.b16 %v654
    %v742 = vunpack.c.l.b16 %v655
    %v743 = vunpack.c.h.b16 %v655
    %v744 = vunpack.c.l.b16 %v656
    %v745 = vunpack.c.h.b16 %v656
    %v746 = vunpack.c.l.b16 %v657
    %v747 = vunpack.c.h.b16 %v657
    %v748 = vunpack.c.l.b16 %v658
    %v749 = vunpack.c.h.b16 %v658
    %v750 = vunpack.c.l.b16 %v659
    %v751 = vunpack.c.h.b16 %v659
    %v752 = vunpack.c.l.b16 %v660
    %v753 = vunpack.c.h.b16 %v660
    %v754 = vunpack.c.l.b16 %v661
    %v755 = vunpack.c.h.b16 %v661
    %v756 = vunpack.c.l.b16 %v662
    %v757 = vunpack.c.h.b16 %v662
    %v758 = vunpack.c.l.b16 %v663
    %v759 = vunpack.c.h.b16 %v663
    %v760 = vunpack.c.l.b16 %v664
    %v761 = vunpack.c.h.b16 %v664
    %v762 = vunpack.c.l.b16 %v665
    %v763 = vunpack.c.h.b16 %v665
    %v764 = vunpack.c.l.b16 %v666
    %v765 = vunpack.c.h.b16 %v666
    %v766 = vunpack.c.l.b16 %v667
    %v767 = vunpack.c.h.b16 %v667
    %v768 = vunpack.c.l.b16 %v668
    %v769 = vunpack.c.h.b16 %v668
    %v770 = vunpack.c.l.b16 %v669
    %v771 = vunpack.c.h.b16 %v669
    %v772 = vunpack.c.l.b16 %v670
    %v773 = vunpack.c.h.b16 %v670
    %v774 = vunpack.c.l.b16 %v671
    %v775 = vunpack.c.h.b16 %v671
    %v776 = vunpack.c.l.b16 %v672
    %v777 = vunpack.c.h.b16 %v672
    %v778 = vunpack.c.l.b16 %v673
    %v779 = vunpack.c.h.b16 %v673
    %v780 = vunpack.c.l.b16 %v674
    %v781 = vunpack.c.h.b16 %v674
    %v782 = vunpack.c.l.b16 %v675
    %v783 = vunpack.c.h.b16 %v675
    %v784 = vpack.c.b16 %v722, %v720
    %v785 = vpack.c.b16 %v723, %v721
    %v786 = vpack.c.b16 %v726, %v724
    %v787 = vpack.c.b16 %v727, %v725
    %v788 = vpack.c.b16 %v730, %v728
    %v789 = vpack.c.b16 %v731, %v729
    %v790 = vpack.c.b16 %v734, %v732
    %v791 = vpack.c.b16 %v735, %v733
    %v792 = vpack.c.b16 %v738, %v736
    %v793 = vpack.c.b16 %v739, %v737
    %v794 = vpack.c.b16 %v742, %v740
    %v795 = vpack.c.b16 %v743, %v741
    %v796 = vpack.c.b16 %v746, %v744
    %v797 = vpack.c.b16 %v747, %v745
    %v798 = vpack.c.b16 %v750, %v748
    %v799 = vpack.c.b16 %v751, %v749
    %v800 = vpack.c.b16 %v754, %v752
    %v801 = vpack.c.b16 %v755, %v753
    %v802 = vpack.c.b16 %v758, %v756
    %v803 = vpack.c.b16 %v759, %v757
    %v804 = vpack.c.b16 %v762, %v760
    %v805 = vpack.c.b16 %v763, %v761
    %v806 = vpack.c.b16 %v766, %v764
    %v807 = vpack.c.b16 %v767, %v765
    %v808 = vpack.c.b16 %v770, %v768
    %v809 = vpack.c.b16 %v771, %v769
    %v810 = vpack.c.b16 %v774, %v772
    %v811 = vpack.c.b16 %v775, %v773
    %v812 = vpack.c.b16 %v778, %v776
    %v813 = vpack.c.b16 %v779, %v777
    %v814 = vpack.c.b16 %v782, %v780
    %v815 = vpack.c.b16 %v783, %v781
    %848 = vmatprep.subr.bf16.mxu0 %v785
    %849 = vmatpush1.bf16.msra.mxu0 %v784
    %850 = vmatprep.subr.bf16.mxu0 %v787
    %851 = vmatpush1.bf16.msra.mxu0 %v786
    %852 = vmatprep.subr.bf16.mxu0 %v789
    %853 = vmatpush1.bf16.msra.mxu0 %v788
    %854 = vmatprep.subr.bf16.mxu0 %v791
    %855 = vmatpush1.bf16.msra.mxu0 %v790
    %856 = vmatprep.subr.bf16.mxu0 %v793
    %857 = vmatpush1.bf16.msra.mxu0 %v792
    %858 = vmatprep.subr.bf16.mxu0 %v795
    %859 = vmatpush1.bf16.msra.mxu0 %v794
    %860 = vmatprep.subr.bf16.mxu0 %v797
    %861 = vmatpush1.bf16.msra.mxu0 %v796
    %862 = vmatprep.subr.bf16.mxu0 %v799
    %863 = vmatpush1.bf16.msra.mxu0 %v798
    %864 = vmatprep.subr.bf16.mxu0 %v801
    %865 = vmatpush1.bf16.msra.mxu0 %v800
    %866 = vmatprep.subr.bf16.mxu0 %v803
    %867 = vmatpush1.bf16.msra.mxu0 %v802
    %868 = vmatprep.subr.bf16.mxu0 %v805
    %869 = vmatpush1.bf16.msra.mxu0 %v804
    %870 = vmatprep.subr.bf16.mxu0 %v807
    %871 = vmatpush1.bf16.msra.mxu0 %v806
    %872 = vmatprep.subr.bf16.mxu0 %v809
    %873 = vmatpush1.bf16.msra.mxu0 %v808
    %874 = vmatprep.subr.bf16.mxu0 %v811
    %875 = vmatpush1.bf16.msra.mxu0 %v810
    %876 = vmatprep.subr.bf16.mxu0 %v813
    %877 = vmatpush1.bf16.msra.mxu0 %v812
    %878 = vmatprep.subr.bf16.mxu0 %v815
    %879 = vmatpush1.bf16.msra.mxu0 %v814
    %880 = vmatprep.mubr.bf16.mxu0 %v643
    %881 = vmatmul.mubr.bf16.gmra.mrb[0].mxu0 %v642
    %v882 = vpop.f32.mrb[0].mxu0
    %v883 = vadd.f32 %v681, %v882
    %v884 = vpop.f32.mrb[0].mxu0
    %v885 = vadd.f32 %v685, %v884
    %v886 = vpop.f32.mrb[0].mxu0
    %v887 = vpop.f32.mrb[0].mxu0
    %888 = vdwg.mxu0
    %v889 = vmax.f32 %v883, 0.0
    %v890 = vmax.f32 %v885, 0.0
    %v891 = vpack.c.bf16 %v889, %v889
    %v892 = vpack.c.bf16 %v890, %v890
    %v893 = vld [vmem:[#allocation6] sm:$0xff]
    %v894 = vld [vmem:[#allocation6 + $0x8] sm:$0xff]
    %v895 = vld [vmem:[#allocation6 + $0x10] sm:$0xff]
    %v896 = vld [vmem:[#allocation6 + $0x18] sm:$0xff]
    %v897 = vld [vmem:[#allocation6 + $0x20] sm:$0xff]
    %v898 = vld [vmem:[#allocation6 + $0x28] sm:$0xff]
    %v899 = vld [vmem:[#allocation6 + $0x30] sm:$0xff]
    %v900 = vld [vmem:[#allocation6 + $0x38] sm:$0xff]
    %v901 = vld [vmem:[#allocation6 + $0x40] sm:$0xff]
    %v902 = vld [vmem:[#allocation6 + $0x48] sm:$0xff]
    %v903 = vld [vmem:[#allocation6 + $0x50] sm:$0xff]
    %v904 = vld [vmem:[#allocation6 + $0x58] sm:$0xff]
    %v905 = vld [vmem:[#allocation6 + $0x60] sm:$0xff]
    %v906 = vld [vmem:[#allocation6 + $0x68] sm:$0xff]
    %v907 = vld [vmem:[#allocation6 + $0x70] sm:$0xff]
    %v908 = vld [vmem:[#allocation6 + $0x78] sm:$0xff]
    %v909 = vld [vmem:[#allocation6 + $0x80] sm:$0xff]
    %v910 = vld [vmem:[#allocation6 + $0x88] sm:$0xff]
    %v911 = vld [vmem:[#allocation6 + $0x90] sm:$0xff]
    %v912 = vld [vmem:[#allocation6 + $0x98] sm:$0xff]
    %v913 = vld [vmem:[#allocation6 + $0xa0] sm:$0xff]
    %v914 = vld [vmem:[#allocation6 + $0xa8] sm:$0xff]
    %v915 = vld [vmem:[#allocation6 + $0xb0] sm:$0xff]
    %v916 = vld [vmem:[#allocation6 + $0xb8] sm:$0xff]
    %v917 = vld [vmem:[#allocation6 + $0xc0] sm:$0xff]
    %v918 = vld [vmem:[#allocation6 + $0xc8] sm:$0xff]
    %v919 = vld [vmem:[#allocation6 + $0xd0] sm:$0xff]
    %v920 = vld [vmem:[#allocation6 + $0xd8] sm:$0xff]
    %v921 = vld [vmem:[#allocation6 + $0xe0] sm:$0xff]
    %v922 = vld [vmem:[#allocation6 + $0xe8] sm:$0xff]
    %v923 = vld [vmem:[#allocation6 + $0xf0] sm:$0xff]
    %v924 = vld [vmem:[#allocation6 + $0xf8] sm:$0xff]
    %v925 = vld [vmem:[%s10] sm:$0x3]
    %v927 = vlaneseq
    %v928 = vshrl.u32 %v927, 7
    %v929 = vsub.s32 0, %v928
    %v930 = vrot.slane %v925, %v929
    %v931 = vlaneseq
    %v932 = vshrl.u32 %v931, 7
    %v933 = vsub.s32 1, %v932
    %v934 = vrot.slane %v925, %v933
    %v969 = vunpack.c.l.b16 %v893
    %v970 = vunpack.c.h.b16 %v893
    %v971 = vunpack.c.l.b16 %v894
    %v972 = vunpack.c.h.b16 %v894
    %v973 = vunpack.c.l.b16 %v895
    %v974 = vunpack.c.h.b16 %v895
    %v975 = vunpack.c.l.b16 %v896
    %v976 = vunpack.c.h.b16 %v896
    %v977 = vunpack.c.l.b16 %v897
    %v978 = vunpack.c.h.b16 %v897
    %v979 = vunpack.c.l.b16 %v898
    %v980 = vunpack.c.h.b16 %v898
    %v981 = vunpack.c.l.b16 %v899
    %v982 = vunpack.c.h.b16 %v899
    %v983 = vunpack.c.l.b16 %v900
    %v984 = vunpack.c.h.b16 %v900
    %v985 = vunpack.c.l.b16 %v901
    %v986 = vunpack.c.h.b16 %v901
    %v987 = vunpack.c.l.b16 %v902
    %v988 = vunpack.c.h.b16 %v902
    %v989 = vunpack.c.l.b16 %v903
    %v990 = vunpack.c.h.b16 %v903
    %v991 = vunpack.c.l.b16 %v904
    %v992 = vunpack.c.h.b16 %v904
    %v993 = vunpack.c.l.b16 %v905
    %v994 = vunpack.c.h.b16 %v905
    %v995 = vunpack.c.l.b16 %v906
    %v996 = vunpack.c.h.b16 %v906
    %v997 = vunpack.c.l.b16 %v907
    %v998 = vunpack.c.h.b16 %v907
    %v999 = vunpack.c.l.b16 %v908
    %v1000 = vunpack.c.h.b16 %v908
    %v1001 = vunpack.c.l.b16 %v909
    %v1002 = vunpack.c.h.b16 %v909
    %v1003 = vunpack.c.l.b16 %v910
    %v1004 = vunpack.c.h.b16 %v910
    %v1005 = vunpack.c.l.b16 %v911
    %v1006 = vunpack.c.h.b16 %v911
    %v1007 = vunpack.c.l.b16 %v912
    %v1008 = vunpack.c.h.b16 %v912
    %v1009 = vunpack.c.l.b16 %v913
    %v1010 = vunpack.c.h.b16 %v913
    %v1011 = vunpack.c.l.b16 %v914
    %v1012 = vunpack.c.h.b16 %v914
    %v1013 = vunpack.c.l.b16 %v915
    %v1014 = vunpack.c.h.b16 %v915
    %v1015 = vunpack.c.l.b16 %v916
    %v1016 = vunpack.c.h.b16 %v916
    %v1017 = vunpack.c.l.b16 %v917
    %v1018 = vunpack.c.h.b16 %v917
    %v1019 = vunpack.c.l.b16 %v918
    %v1020 = vunpack.c.h.b16 %v918
    %v1021 = vunpack.c.l.b16 %v919
    %v1022 = vunpack.c.h.b16 %v919
    %v1023 = vunpack.c.l.b16 %v920
    %v1024 = vunpack.c.h.b16 %v920
    %v1025 = vunpack.c.l.b16 %v921
    %v1026 = vunpack.c.h.b16 %v921
    %v1027 = vunpack.c.l.b16 %v922
    %v1028 = vunpack.c.h.b16 %v922
    %v1029 = vunpack.c.l.b16 %v923
    %v1030 = vunpack.c.h.b16 %v923
    %v1031 = vunpack.c.l.b16 %v924
    %v1032 = vunpack.c.h.b16 %v924
    %v1033 = vpack.c.b16 %v971, %v969
    %v1034 = vpack.c.b16 %v972, %v970
    %v1035 = vpack.c.b16 %v975, %v973
    %v1036 = vpack.c.b16 %v976, %v974
    %v1037 = vpack.c.b16 %v979, %v977
    %v1038 = vpack.c.b16 %v980, %v978
    %v1039 = vpack.c.b16 %v983, %v981
    %v1040 = vpack.c.b16 %v984, %v982
    %v1041 = vpack.c.b16 %v987, %v985
    %v1042 = vpack.c.b16 %v988, %v986
    %v1043 = vpack.c.b16 %v991, %v989
    %v1044 = vpack.c.b16 %v992, %v990
    %v1045 = vpack.c.b16 %v995, %v993
    %v1046 = vpack.c.b16 %v996, %v994
    %v1047 = vpack.c.b16 %v999, %v997
    %v1048 = vpack.c.b16 %v1000, %v998
    %v1049 = vpack.c.b16 %v1003, %v1001
    %v1050 = vpack.c.b16 %v1004, %v1002
    %v1051 = vpack.c.b16 %v1007, %v1005
    %v1052 = vpack.c.b16 %v1008, %v1006
    %v1053 = vpack.c.b16 %v1011, %v1009
    %v1054 = vpack.c.b16 %v1012, %v1010
    %v1055 = vpack.c.b16 %v1015, %v1013
    %v1056 = vpack.c.b16 %v1016, %v1014
    %v1057 = vpack.c.b16 %v1019, %v1017
    %v1058 = vpack.c.b16 %v1020, %v1018
    %v1059 = vpack.c.b16 %v1023, %v1021
    %v1060 = vpack.c.b16 %v1024, %v1022
    %v1061 = vpack.c.b16 %v1027, %v1025
    %v1062 = vpack.c.b16 %v1028, %v1026
    %v1063 = vpack.c.b16 %v1031, %v1029
    %v1064 = vpack.c.b16 %v1032, %v1030
    %1097 = vmatprep.subr.bf16.mxu0 %v1034
    %1098 = vmatpush1.bf16.msra.mxu0 %v1033
    %1099 = vmatprep.subr.bf16.mxu0 %v1036
    %1100 = vmatpush1.bf16.msra.mxu0 %v1035
    %1101 = vmatprep.subr.bf16.mxu0 %v1038
    %1102 = vmatpush1.bf16.msra.mxu0 %v1037
    %1103 = vmatprep.subr.bf16.mxu0 %v1040
    %1104 = vmatpush1.bf16.msra.mxu0 %v1039
    %1105 = vmatprep.subr.bf16.mxu0 %v1042
    %1106 = vmatpush1.bf16.msra.mxu0 %v1041
    %1107 = vmatprep.subr.bf16.mxu0 %v1044
    %1108 = vmatpush1.bf16.msra.mxu0 %v1043
    %1109 = vmatprep.subr.bf16.mxu0 %v1046
    %1110 = vmatpush1.bf16.msra.mxu0 %v1045
    %1111 = vmatprep.subr.bf16.mxu0 %v1048
    %1112 = vmatpush1.bf16.msra.mxu0 %v1047
    %1113 = vmatprep.subr.bf16.mxu0 %v1050
    %1114 = vmatpush1.bf16.msra.mxu0 %v1049
    %1115 = vmatprep.subr.bf16.mxu0 %v1052
    %1116 = vmatpush1.bf16.msra.mxu0 %v1051
    %1117 = vmatprep.subr.bf16.mxu0 %v1054
    %1118 = vmatpush1.bf16.msra.mxu0 %v1053
    %1119 = vmatprep.subr.bf16.mxu0 %v1056
    %1120 = vmatpush1.bf16.msra.mxu0 %v1055
    %1121 = vmatprep.subr.bf16.mxu0 %v1058
    %1122 = vmatpush1.bf16.msra.mxu0 %v1057
    %1123 = vmatprep.subr.bf16.mxu0 %v1060
    %1124 = vmatpush1.bf16.msra.mxu0 %v1059
    %1125 = vmatprep.subr.bf16.mxu0 %v1062
    %1126 = vmatpush1.bf16.msra.mxu0 %v1061
    %1127 = vmatprep.subr.bf16.mxu0 %v1064
    %1128 = vmatpush1.bf16.msra.mxu0 %v1063
    %1129 = vmatprep.mubr.bf16.mxu0 %v892
    %1130 = vmatmul.mubr.bf16.gmra.mrb[0].mxu0 %v891
    %v1131 = vpop.f32.mrb[0].mxu0
    %v1132 = vadd.f32 %v930, %v1131
    %v1133 = vpop.f32.mrb[0].mxu0
    %v1134 = vadd.f32 %v934, %v1133
    %v1135 = vpop.f32.mrb[0].mxu0
    %v1136 = vpop.f32.mrb[0].mxu0
    %1137 = vdwg.mxu0
    %v1138 = vmax.f32 %v1132, 0.0
    %v1139 = vmax.f32 %v1134, 0.0
    %v1140 = vpack.c.bf16 %v1138, %v1138
    %v1141 = vpack.c.bf16 %v1139, %v1139
    %v1142 = vld [vmem:[#allocation7] sm:$0xff]
    %v1143 = vld [vmem:[#allocation7 + $0x8] sm:$0xff]
    %v1144 = vld [vmem:[#allocation7 + $0x10] sm:$0xff]
    %v1145 = vld [vmem:[#allocation7 + $0x18] sm:$0xff]
    %v1146 = vld [vmem:[#allocation7 + $0x20] sm:$0xff]
    %v1147 = vld [vmem:[#allocation7 + $0x28] sm:$0xff]
    %v1148 = vld [vmem:[#allocation7 + $0x30] sm:$0xff]
    %v1149 = vld [vmem:[#allocation7 + $0x38] sm:$0xff]
    %v1150 = vld [vmem:[#allocation7 + $0x40] sm:$0xff]
    %v1151 = vld [vmem:[#allocation7 + $0x48] sm:$0xff]
    %v1152 = vld [vmem:[#allocation7 + $0x50] sm:$0xff]
    %v1153 = vld [vmem:[#allocation7 + $0x58] sm:$0xff]
    %v1154 = vld [vmem:[#allocation7 + $0x60] sm:$0xff]
    %v1155 = vld [vmem:[#allocation7 + $0x68] sm:$0xff]
    %v1156 = vld [vmem:[#allocation7 + $0x70] sm:$0xff]
    %v1157 = vld [vmem:[#allocation7 + $0x78] sm:$0xff]
    %v1158 = vld [vmem:[#allocation7 + $0x80] sm:$0xff]
    %v1159 = vld [vmem:[#allocation7 + $0x88] sm:$0xff]
    %v1160 = vld [vmem:[#allocation7 + $0x90] sm:$0xff]
    %v1161 = vld [vmem:[#allocation7 + $0x98] sm:$0xff]
    %v1162 = vld [vmem:[#allocation7 + $0xa0] sm:$0xff]
    %v1163 = vld [vmem:[#allocation7 + $0xa8] sm:$0xff]
    %v1164 = vld [vmem:[#allocation7 + $0xb0] sm:$0xff]
    %v1165 = vld [vmem:[#allocation7 + $0xb8] sm:$0xff]
    %v1166 = vld [vmem:[#allocation7 + $0xc0] sm:$0xff]
    %v1167 = vld [vmem:[#allocation7 + $0xc8] sm:$0xff]
    %v1168 = vld [vmem:[#allocation7 + $0xd0] sm:$0xff]
    %v1169 = vld [vmem:[#allocation7 + $0xd8] sm:$0xff]
    %v1170 = vld [vmem:[#allocation7 + $0xe0] sm:$0xff]
    %v1171 = vld [vmem:[#allocation7 + $0xe8] sm:$0xff]
    %v1172 = vld [vmem:[#allocation7 + $0xf0] sm:$0xff]
    %v1173 = vld [vmem:[#allocation7 + $0xf8] sm:$0xff]
    %v1174 = vld [vmem:[%s12] sm:$0x3]
    %v1176 = vlaneseq
    %v1177 = vshrl.u32 %v1176, 7
    %v1178 = vsub.s32 0, %v1177
    %v1179 = vrot.slane %v1174, %v1178
    %v1180 = vlaneseq
    %v1181 = vshrl.u32 %v1180, 7
    %v1182 = vsub.s32 1, %v1181
    %v1183 = vrot.slane %v1174, %v1182
    %v1218 = vunpack.c.l.b16 %v1142
    %v1219 = vunpack.c.h.b16 %v1142
    %v1220 = vunpack.c.l.b16 %v1143
    %v1221 = vunpack.c.h.b16 %v1143
    %v1222 = vunpack.c.l.b16 %v1144
    %v1223 = vunpack.c.h.b16 %v1144
    %v1224 = vunpack.c.l.b16 %v1145
    %v1225 = vunpack.c.h.b16 %v1145
    %v1226 = vunpack.c.l.b16 %v1146
    %v1227 = vunpack.c.h.b16 %v1146
    %v1228 = vunpack.c.l.b16 %v1147
    %v1229 = vunpack.c.h.b16 %v1147
    %v1230 = vunpack.c.l.b16 %v1148
    %v1231 = vunpack.c.h.b16 %v1148
    %v1232 = vunpack.c.l.b16 %v1149
    %v1233 = vunpack.c.h.b16 %v1149
    %v1234 = vunpack.c.l.b16 %v1150
    %v1235 = vunpack.c.h.b16 %v1150
    %v1236 = vunpack.c.l.b16 %v1151
    %v1237 = vunpack.c.h.b16 %v1151
    %v1238 = vunpack.c.l.b16 %v1152
    %v1239 = vunpack.c.h.b16 %v1152
    %v1240 = vunpack.c.l.b16 %v1153
    %v1241 = vunpack.c.h.b16 %v1153
    %v1242 = vunpack.c.l.b16 %v1154
    %v1243 = vunpack.c.h.b16 %v1154
    %v1244 = vunpack.c.l.b16 %v1155
    %v1245 = vunpack.c.h.b16 %v1155
    %v1246 = vunpack.c.l.b16 %v1156
    %v1247 = vunpack.c.h.b16 %v1156
    %v1248 = vunpack.c.l.b16 %v1157
    %v1249 = vunpack.c.h.b16 %v1157
    %v1250 = vunpack.c.l.b16 %v1158
    %v1251 = vunpack.c.h.b16 %v1158
    %v1252 = vunpack.c.l.b16 %v1159
    %v1253 = vunpack.c.h.b16 %v1159
    %v1254 = vunpack.c.l.b16 %v1160
    %v1255 = vunpack.c.h.b16 %v1160
    %v1256 = vunpack.c.l.b16 %v1161
    %v1257 = vunpack.c.h.b16 %v1161
    %v1258 = vunpack.c.l.b16 %v1162
    %v1259 = vunpack.c.h.b16 %v1162
    %v1260 = vunpack.c.l.b16 %v1163
    %v1261 = vunpack.c.h.b16 %v1163
    %v1262 = vunpack.c.l.b16 %v1164
    %v1263 = vunpack.c.h.b16 %v1164
    %v1264 = vunpack.c.l.b16 %v1165
    %v1265 = vunpack.c.h.b16 %v1165
    %v1266 = vunpack.c.l.b16 %v1166
    %v1267 = vunpack.c.h.b16 %v1166
    %v1268 = vunpack.c.l.b16 %v1167
    %v1269 = vunpack.c.h.b16 %v1167
    %v1270 = vunpack.c.l.b16 %v1168
    %v1271 = vunpack.c.h.b16 %v1168
    %v1272 = vunpack.c.l.b16 %v1169
    %v1273 = vunpack.c.h.b16 %v1169
    %v1274 = vunpack.c.l.b16 %v1170
    %v1275 = vunpack.c.h.b16 %v1170
    %v1276 = vunpack.c.l.b16 %v1171
    %v1277 = vunpack.c.h.b16 %v1171
    %v1278 = vunpack.c.l.b16 %v1172
    %v1279 = vunpack.c.h.b16 %v1172
    %v1280 = vunpack.c.l.b16 %v1173
    %v1281 = vunpack.c.h.b16 %v1173
    %v1282 = vpack.c.b16 %v1220, %v1218
    %v1283 = vpack.c.b16 %v1221, %v1219
    %v1284 = vpack.c.b16 %v1224, %v1222
    %v1285 = vpack.c.b16 %v1225, %v1223
    %v1286 = vpack.c.b16 %v1228, %v1226
    %v1287 = vpack.c.b16 %v1229, %v1227
    %v1288 = vpack.c.b16 %v1232, %v1230
    %v1289 = vpack.c.b16 %v1233, %v1231
    %v1290 = vpack.c.b16 %v1236, %v1234
    %v1291 = vpack.c.b16 %v1237, %v1235
    %v1292 = vpack.c.b16 %v1240, %v1238
    %v1293 = vpack.c.b16 %v1241, %v1239
    %v1294 = vpack.c.b16 %v1244, %v1242
    %v1295 = vpack.c.b16 %v1245, %v1243
    %v1296 = vpack.c.b16 %v1248, %v1246
    %v1297 = vpack.c.b16 %v1249, %v1247
    %v1298 = vpack.c.b16 %v1252, %v1250
    %v1299 = vpack.c.b16 %v1253, %v1251
    %v1300 = vpack.c.b16 %v1256, %v1254
    %v1301 = vpack.c.b16 %v1257, %v1255
    %v1302 = vpack.c.b16 %v1260, %v1258
    %v1303 = vpack.c.b16 %v1261, %v1259
    %v1304 = vpack.c.b16 %v1264, %v1262
    %v1305 = vpack.c.b16 %v1265, %v1263
    %v1306 = vpack.c.b16 %v1268, %v1266
    %v1307 = vpack.c.b16 %v1269, %v1267
    %v1308 = vpack.c.b16 %v1272, %v1270
    %v1309 = vpack.c.b16 %v1273, %v1271
    %v1310 = vpack.c.b16 %v1276, %v1274
    %v1311 = vpack.c.b16 %v1277, %v1275
    %v1312 = vpack.c.b16 %v1280, %v1278
    %v1313 = vpack.c.b16 %v1281, %v1279
    %1346 = vmatprep.subr.bf16.mxu0 %v1283
    %1347 = vmatpush1.bf16.msra.mxu0 %v1282
    %1348 = vmatprep.subr.bf16.mxu0 %v1285
    %1349 = vmatpush1.bf16.msra.mxu0 %v1284
    %1350 = vmatprep.subr.bf16.mxu0 %v1287
    %1351 = vmatpush1.bf16.msra.mxu0 %v1286
    %1352 = vmatprep.subr.bf16.mxu0 %v1289
    %1353 = vmatpush1.bf16.msra.mxu0 %v1288
    %1354 = vmatprep.subr.bf16.mxu0 %v1291
    %1355 = vmatpush1.bf16.msra.mxu0 %v1290
    %1356 = vmatprep.subr.bf16.mxu0 %v1293
    %1357 = vmatpush1.bf16.msra.mxu0 %v1292
    %1358 = vmatprep.subr.bf16.mxu0 %v1295
    %1359 = vmatpush1.bf16.msra.mxu0 %v1294
    %1360 = vmatprep.subr.bf16.mxu0 %v1297
    %1361 = vmatpush1.bf16.msra.mxu0 %v1296
    %1362 = vmatprep.subr.bf16.mxu0 %v1299
    %1363 = vmatpush1.bf16.msra.mxu0 %v1298
    %1364 = vmatprep.subr.bf16.mxu0 %v1301
    %1365 = vmatpush1.bf16.msra.mxu0 %v1300
    %1366 = vmatprep.subr.bf16.mxu0 %v1303
    %1367 = vmatpush1.bf16.msra.mxu0 %v1302
    %1368 = vmatprep.subr.bf16.mxu0 %v1305
    %1369 = vmatpush1.bf16.msra.mxu0 %v1304
    %1370 = vmatprep.subr.bf16.mxu0 %v1307
    %1371 = vmatpush1.bf16.msra.mxu0 %v1306
    %1372 = vmatprep.subr.bf16.mxu0 %v1309
    %1373 = vmatpush1.bf16.msra.mxu0 %v1308
    %1374 = vmatprep.subr.bf16.mxu0 %v1311
    %1375 = vmatpush1.bf16.msra.mxu0 %v1310
    %1376 = vmatprep.subr.bf16.mxu0 %v1313
    %1377 = vmatpush1.bf16.msra.mxu0 %v1312
    %1378 = vmatprep.mubr.bf16.mxu0 %v1141
    %1379 = vmatmul.mubr.bf16.gmra.mrb[0].mxu0 %v1140
    %v1380 = vpop.f32.mrb[0].mxu0
    %v1381 = vadd.f32 %v1179, %v1380
    %v1382 = vpop.f32.mrb[0].mxu0
    %v1383 = vadd.f32 %v1183, %v1382
    %v1384 = vpop.f32.mrb[0].mxu0
    %v1385 = vpop.f32.mrb[0].mxu0
    %1386 = vdwg.mxu0
    %v1387 = vmax.f32 %v1381, 0.0
    %v1388 = vmax.f32 %v1383, 0.0
    %v1389 = vpack.c.bf16 %v1387, %v1387
    %v1390 = vpack.c.bf16 %v1388, %v1388
    %v1391 = vld [vmem:[%s13] sm:$0xf]
    %v1392 = vld [vmem:[%s13 + $0x4] sm:$0xf]
    %v1393 = vld [vmem:[%s13 + $0x8] sm:$0xf]
    %v1394 = vld [vmem:[%s13 + $0xc] sm:$0xf]
    %v1395 = vld [vmem:[%s13 + $0x10] sm:$0xf]
    %v1396 = vld [vmem:[%s13 + $0x14] sm:$0xf]
    %v1397 = vld [vmem:[%s13 + $0x18] sm:$0xf]
    %v1398 = vld [vmem:[%s13 + $0x1c] sm:$0xf]
    %v1399 = vld [vmem:[%s13 + $0x20] sm:$0xf]
    %v1400 = vld [vmem:[%s13 + $0x24] sm:$0xf]
    %v1401 = vld [vmem:[%s13 + $0x28] sm:$0xf]
    %v1402 = vld [vmem:[%s13 + $0x2c] sm:$0xf]
    %v1403 = vld [vmem:[%s13 + $0x30] sm:$0xf]
    %v1404 = vld [vmem:[%s13 + $0x34] sm:$0xf]
    %v1405 = vld [vmem:[%s13 + $0x38] sm:$0xf]
    %v1406 = vld [vmem:[%s13 + $0x3c] sm:$0xf]
    %v1407 = vld [vmem:[%s13 + $0x40] sm:$0xf]
    %v1408 = vld [vmem:[%s13 + $0x44] sm:$0xf]
    %v1409 = vld [vmem:[%s13 + $0x48] sm:$0xf]
    %v1410 = vld [vmem:[%s13 + $0x4c] sm:$0xf]
    %v1411 = vld [vmem:[%s13 + $0x50] sm:$0xf]
    %v1412 = vld [vmem:[%s13 + $0x54] sm:$0xf]
    %v1413 = vld [vmem:[%s13 + $0x58] sm:$0xf]
    %v1414 = vld [vmem:[%s13 + $0x5c] sm:$0xf]
    %v1415 = vld [vmem:[%s13 + $0x60] sm:$0xf]
    %v1416 = vld [vmem:[%s13 + $0x64] sm:$0xf]
    %v1417 = vld [vmem:[%s13 + $0x68] sm:$0xf]
    %v1418 = vld [vmem:[%s13 + $0x6c] sm:$0xf]
    %v1419 = vld [vmem:[%s13 + $0x70] sm:$0xf]
    %v1420 = vld [vmem:[%s13 + $0x74] sm:$0xf]
    %v1421 = vld [vmem:[%s13 + $0x78] sm:$0xf]
    %v1422 = vld [vmem:[%s13 + $0x7c] sm:$0xf]
    %v1423 = vld [vmem:[%s14] sm:$0x1]
    %v1425 = vlaneseq
    %v1426 = vshrl.u32 %v1425, 7
    %v1427 = vsub.s32 0, %v1426
    %v1428 = vrot.slane %v1423, %v1427
    %v1462 = vunpack.c.l.b16 %v1391
    %v1463 = vunpack.c.l.b16 %v1392
    %v1464 = vunpack.c.l.b16 %v1393
    %v1465 = vunpack.c.l.b16 %v1394
    %v1466 = vunpack.c.l.b16 %v1395
    %v1467 = vunpack.c.l.b16 %v1396
    %v1468 = vunpack.c.l.b16 %v1397
    %v1469 = vunpack.c.l.b16 %v1398
    %v1470 = vunpack.c.l.b16 %v1399
    %v1471 = vunpack.c.l.b16 %v1400
    %v1472 = vunpack.c.l.b16 %v1401
    %v1473 = vunpack.c.l.b16 %v1402
    %v1474 = vunpack.c.l.b16 %v1403
    %v1475 = vunpack.c.l.b16 %v1404
    %v1476 = vunpack.c.l.b16 %v1405
    %v1477 = vunpack.c.l.b16 %v1406
    %v1478 = vunpack.c.l.b16 %v1407
    %v1479 = vunpack.c.l.b16 %v1408
    %v1480 = vunpack.c.l.b16 %v1409
    %v1481 = vunpack.c.l.b16 %v1410
    %v1482 = vunpack.c.l.b16 %v1411
    %v1483 = vunpack.c.l.b16 %v1412
    %v1484 = vunpack.c.l.b16 %v1413
    %v1485 = vunpack.c.l.b16 %v1414
    %v1486 = vunpack.c.l.b16 %v1415
    %v1487 = vunpack.c.l.b16 %v1416
    %v1488 = vunpack.c.l.b16 %v1417
    %v1489 = vunpack.c.l.b16 %v1418
    %v1490 = vunpack.c.l.b16 %v1419
    %v1491 = vunpack.c.l.b16 %v1420
    %v1492 = vunpack.c.l.b16 %v1421
    %v1493 = vunpack.c.l.b16 %v1422
    %v1494 = vpack.c.b16 %v1463, %v1462
    %v1495 = vpack.c.b16 %v1465, %v1464
    %v1496 = vpack.c.b16 %v1467, %v1466
    %v1497 = vpack.c.b16 %v1469, %v1468
    %v1498 = vpack.c.b16 %v1471, %v1470
    %v1499 = vpack.c.b16 %v1473, %v1472
    %v1500 = vpack.c.b16 %v1475, %v1474
    %v1501 = vpack.c.b16 %v1477, %v1476
    %v1502 = vpack.c.b16 %v1479, %v1478
    %v1503 = vpack.c.b16 %v1481, %v1480
    %v1504 = vpack.c.b16 %v1483, %v1482
    %v1505 = vpack.c.b16 %v1485, %v1484
    %v1506 = vpack.c.b16 %v1487, %v1486
    %v1507 = vpack.c.b16 %v1489, %v1488
    %v1508 = vpack.c.b16 %v1491, %v1490
    %v1509 = vpack.c.b16 %v1493, %v1492
    %1526 = vmatprep.subr.bf16.mxu0 0
    %1527 = vmatpush1.bf16.msra.mxu0 %v1494
    %1528 = vmatprep.subr.bf16.mxu0 0
    %1529 = vmatpush1.bf16.msra.mxu0 %v1495
    %1530 = vmatprep.subr.bf16.mxu0 0
    %1531 = vmatpush1.bf16.msra.mxu0 %v1496
    %1532 = vmatprep.subr.bf16.mxu0 0
    %1533 = vmatpush1.bf16.msra.mxu0 %v1497
    %1534 = vmatprep.subr.bf16.mxu0 0
    %1535 = vmatpush1.bf16.msra.mxu0 %v1498
    %1536 = vmatprep.subr.bf16.mxu0 0
    %1537 = vmatpush1.bf16.msra.mxu0 %v1499
    %1538 = vmatprep.subr.bf16.mxu0 0
    %1539 = vmatpush1.bf16.msra.mxu0 %v1500
    %1540 = vmatprep.subr.bf16.mxu0 0
    %1541 = vmatpush1.bf16.msra.mxu0 %v1501
    %1542 = vmatprep.subr.bf16.mxu0 0
    %1543 = vmatpush1.bf16.msra.mxu0 %v1502
    %1544 = vmatprep.subr.bf16.mxu0 0
    %1545 = vmatpush1.bf16.msra.mxu0 %v1503
    %1546 = vmatprep.subr.bf16.mxu0 0
    %1547 = vmatpush1.bf16.msra.mxu0 %v1504
    %1548 = vmatprep.subr.bf16.mxu0 0
    %1549 = vmatpush1.bf16.msra.mxu0 %v1505
    %1550 = vmatprep.subr.bf16.mxu0 0
    %1551 = vmatpush1.bf16.msra.mxu0 %v1506
    %1552 = vmatprep.subr.bf16.mxu0 0
    %1553 = vmatpush1.bf16.msra.mxu0 %v1507
    %1554 = vmatprep.subr.bf16.mxu0 0
    %1555 = vmatpush1.bf16.msra.mxu0 %v1508
    %1556 = vmatprep.subr.bf16.mxu0 0
    %1557 = vmatpush1.bf16.msra.mxu0 %v1509
    %1558 = vmatprep.mubr.bf16.mxu0 %v1390
    %1559 = vmatmul.mubr.bf16.gmra.mrb[0].mxu0 %v1389
    %v1560 = vpop.f32.mrb[0].mxu0
    %v1561 = vadd.f32 %v1428, %v1560
    %v1562 = vpop.f32.mrb[0].mxu0
    %v1563 = vpop.f32.mrb[0].mxu0
    %v1564 = vpop.f32.mrb[0].mxu0
    %1565 = vdwg.mxu0
    %v1566 = vxor.u32 %v1561, 2147483648
    %v1567 = vmul.f32 %v1566, 1.442695
    %v1568 = vpow.pop %v1567
    %v1569 = vadd.f32 %v1568, 1.0
    %v1570 = vrcp.pop %v1569
    %v1571 = vmul.f32 1.0, %v1570
    %vm1572 = vcmask 23552
    %1573 = vst.msk [vmem:[%s15] sm:$0xff] %vm1572, %v1571
    // Predicated region
    $region78: #{tpu_custom_call.1} parent=1 // pred_check
      _
    $region79: #{tpu_custom_call.1} parent=1 // pred_check_branch
      %1575 = sbr.rel (0) target = $region81
    $region80: #{tpu_custom_call.1} parent=1 // pred_region
      _
    $region81: #{tpu_custom_call.1} parent=1 // pred_fallthru
      _
    // Predicated region
    $region82: #{tpu_custom_call.1} parent=1 // pred_check
      _
    $region83: #{tpu_custom_call.1} parent=1 // pred_check_branch
      %1577 = sbr.rel (0) target = $region85
    $region84: #{tpu_custom_call.1} parent=1 // pred_region
      _
    $region85: #{tpu_custom_call.1} parent=1 // pred_fallthru
      _
    %1578 = vsyncpa [#allocation3], 1
    %1579 = vsyncpa [#allocation5], 1
    %1580 = vsyncpa [#allocation8], 1

</llo_original>
